<compile_context>
chip_gen: v7x
topology: tpu7x:2x2x1
jax: 0.10.0
libtpu: 0.0.40
codegen_flags: <defaults>
</compile_context>

<pallas_src>
import jax
import jax.numpy as jnp
import numpy as np
from jax.experimental import pallas as pl
from jax.experimental.pallas import tpu as pltpu

_LANE = 128
_SUBLANE = 8


def _round_up(v: int, m: int) -> int:
    return (v + m - 1) // m * m


def _vmem_capacity_bytes() -> int:
    """Generation-aware VMEM capacity; conservative (v7x) fallback off-TPU."""
    try:
        return int(pltpu.get_tpu_info().vmem_capacity_bytes)
    except Exception:
        return 64 << 20


def _make_mlp_kernel(n_hidden_layers: int, skip_connections: bool):
    """Fused MLP body: n_hidden_layers x (Linear [+skip if odd] -> ReLU) -> output Linear."""

    def kernel(*refs):
        x_ref = refs[0]
        o_ref = refs[-1]
        p = refs[1:-1]  # flat: (w0, b0), ..., (w_{L-1}, b_{L-1}), (w_out, b_out)

        def linear(h_bf16, w_ref, b_ref):
            # bf16 MXU operands, f32 accumulation; bias add stays f32 on the VPU.
            return (
                jnp.dot(h_bf16, w_ref[...], preferred_element_type=jnp.float32)
                + b_ref[...]
            )

        h_bf16 = x_ref[...]          # already bf16 and lane-padded: no cast chain
        h_f32 = None
        for layer_idx in range(n_hidden_layers):
            w_ref, b_ref = p[2 * layer_idx], p[2 * layer_idx + 1]
            y = linear(h_bf16, w_ref, b_ref)
            if skip_connections and (layer_idx % 2 == 1):
                y = y + h_f32                # x = x + layer(x), matches torch forward
            h_f32 = jnp.maximum(y, 0.0)      # ReLU in f32 (v5e-safe elementwise)
            h_bf16 = h_f32.astype(jnp.bfloat16)
            # dropout(p=0.0) is identity at inference
        o_ref[...] = linear(h_bf16, p[-2], p[-1]).astype(o_ref.dtype)

    return kernel


def mlp_forward(x, layers, *, skip_connections: bool, tm: int | None = None):
    """Fused Pallas forward pass.

    x:      [batch, input_size] float array.
    layers: list of (w, b); w is [in, out] (already transposed vs. torch [out, in]),
            b is [out].  The last pair is the output layer, the rest are hidden layers.
    """
    B, in_dim = x.shape
    n_hidden_layers = len(layers) - 1
    out_dim = layers[-1][0].shape[1]

    # ---- lane-pad feature dims to 128, cast weights to bf16, biases stay f32 ----
    def pad2(a, rows, cols):
        return jnp.pad(a, ((0, rows - a.shape[0]), (0, cols - a.shape[1])))

    padded_params = []
    feat_pads = []
    for (w, b) in layers:
        fi, fo = w.shape
        fi_p, fo_p = _round_up(fi, _LANE), _round_up(fo, _LANE)
        feat_pads += [fi_p, fo_p]
        w_p = pad2(w.astype(jnp.float32), fi_p, fo_p).astype(jnp.bfloat16)
        b_p = pad2(b.reshape(1, -1).astype(jnp.float32), 1, fo_p)
        padded_params += [w_p, b_p]

    in_pad = _round_up(in_dim, _LANE)
    out_pad = _round_up(out_dim, _LANE)
    max_feat = max(feat_pads)
    param_bytes = sum(int(np.prod(p.shape)) * p.dtype.itemsize for p in padded_params)

    # ---- generation-aware VMEM budget ----
    vmem_cap = _vmem_capacity_bytes()
    vmem_budget_cap = int(min(100 << 20, vmem_cap * 3 // 4))  # ~96 MiB on 128 MiB parts, 48 MiB on v7x
    # TODO(synk): weight-streaming fallback (per-layer emit_pipeline from HBM) when
    # resident params exceed ~1/3 of a generation's VMEM; not needed at these sizes.

    # ---- batch tile selection (VMEM-derived ceiling, generation-aware) ----
    if tm is None:
        tm = 512 if B >= 1024 else 256
    tm = max(_SUBLANE, _round_up(tm, _SUBLANE))
    # Per-row VMEM: double-buffered bf16 x tile + f32 out tile, plus ~4 live f32 temps.
    per_row = 2 * (in_pad * 2) + 2 * (out_pad * 4) + 4 * (max_feat * 4)
    avail = max(vmem_budget_cap - param_bytes, per_row * _SUBLANE)
    tm_ceiling = max(_SUBLANE, (avail // per_row) // _SUBLANE * _SUBLANE)
    tm = min(tm, tm_ceiling)

    b_sub = _round_up(B, _SUBLANE)
    tm_eff = min(tm, b_sub)
    # Prefer >= 2 batch tiles so "parallel" semantics can shard across v7x's 2 TCs.
    if b_sub // tm_eff < 2 and b_sub > _SUBLANE:
        tm_eff = max(_SUBLANE, _round_up(pl.cdiv(b_sub, 2), _SUBLANE))
    B_pad = _round_up(B, tm_eff)
    grid = (B_pad // tm_eff,)

    x_p = jnp.pad(x.astype(jnp.float32), ((0, B_pad - B), (0, in_pad - in_dim)))
    x_p = x_p.astype(jnp.bfloat16)  # halve x DMA traffic; MXU is bf16-native

    kernel = _make_mlp_kernel(n_hidden_layers, skip_connections)
    out_shape = jax.ShapeDtypeStruct((B_pad, out_pad), jnp.float32)

    flops = 2 * B_pad * sum(int(w.shape[0]) * int(w.shape[1]) for w in padded_params[::2])
    bytes_accessed = int(x_p.size) * 2 + param_bytes + B_pad * out_pad * 4
    cost = pl.CostEstimate(flops=flops, transcendentals=0, bytes_accessed=bytes_accessed)

    def _run(single_buffer_params: bool):
        x_spec = pl.BlockSpec((tm_eff, in_pad), lambda i: (i, 0))
        out_spec = pl.BlockSpec((tm_eff, out_pad), lambda i: (i, 0))
        param_specs = []
        for p_arr in padded_params:
            if single_buffer_params:
                # Grid-invariant params: one resident copy, no second pipeline buffer.
                spec = pl.BlockSpec(p_arr.shape, lambda i: (0, 0),
                                    pipeline_mode=pl.Buffered(1))
            else:
                spec = pl.BlockSpec(p_arr.shape, lambda i: (0, 0))
            param_specs.append(spec)

        # VMEM estimate: double-buffered I/O tiles + resident params + f32 temporaries.
        pbuf = 1 if single_buffer_params else 2
        vmem_need = 2 * tm_eff * (in_pad * 2 + out_pad * 4)
        vmem_need += pbuf * param_bytes
        vmem_need += 4 * tm_eff * max_feat * 4
        vmem_limit = int(min(max(vmem_need * 3 // 2, 16 << 20), vmem_budget_cap))

        return pl.pallas_call(
            kernel,
            out_shape=out_shape,
            grid_spec=pltpu.PrefetchScalarGridSpec(
                num_scalar_prefetch=0,
                grid=grid,
                in_specs=[x_spec] + param_specs,
                out_specs=out_spec,
            ),
            compiler_params=pltpu.CompilerParams(
                dimension_semantics=("parallel",),   # shards batch tiles across v7x TCs
                vmem_limit_bytes=vmem_limit,
            ),
            cost_estimate=cost,
        )(x_p, *padded_params)

    try:
        out_padded = _run(True)
    except Exception:
        # Fallback if this jax build rejects single-buffered (Buffered(1)) BlockSpecs.
        out_padded = _run(False)

    return out_padded[:B, :out_dim]


def _init_linear(key, fan_in, fan_out):
    """Deterministic init mimicking PyTorch nn.Linear defaults (uniform +-1/sqrt(fan_in))."""
    kw, kb = jax.random.split(key)
    bound = 1.0 / np.sqrt(fan_in)
    # stored transposed: [in, out]
    w = jax.random.uniform(kw, (fan_in, fan_out), jnp.float32, -bound, bound)
    b = jax.random.uniform(kb, (fan_out,), jnp.float32, -bound, bound)
    return w, b


def _reference_forward(x, layers, skip_connections):
    """Pure-JAX reference with matching bf16-operand / f32-accumulate matmuls."""

    def linear(h, w, b):
        return jnp.dot(h.astype(jnp.bfloat16), w.astype(jnp.bfloat16),
                       preferred_element_type=jnp.float32) + b

    h = x.astype(jnp.float32)
    for layer_idx, (w, b) in enumerate(layers[:-1]):
        y = linear(h, w, b)
        if skip_connections and (layer_idx % 2 == 1):
            y = y + h
        h = jnp.maximum(y, 0.0)
    w_out, b_out = layers[-1]
    return linear(h, w_out, b_out)


if __name__ == "__main__":
    key = jax.random.PRNGKey(0)
    batch = 100            # intentionally NOT a multiple of the batch tile -> padding + 2 tiles
    input_size = 32
    hidden_size = 32
    output_size = 16
    n_hidden_layers = 3
    skip_connections = True
    # dropout = 0.0 -> identity (module default inference path)

    keys = jax.random.split(key, n_hidden_layers + 2)
    x = jax.random.normal(keys[0], (batch, input_size), jnp.float32)

    layers = []
    fan_in = input_size
    for li in range(n_hidden_layers):
        layers.append(_init_linear(keys[1 + li], fan_in, hidden_size))
        fan_in = hidden_size
    layers.append(_init_linear(keys[1 + n_hidden_layers], hidden_size, output_size))

    out = mlp_forward(x, layers, skip_connections=skip_connections)
    out = jax.block_until_ready(out)

    ref = _reference_forward(x, layers, skip_connections)
    np.testing.assert_allclose(np.asarray(out), np.asarray(ref), atol=2e-3, rtol=2e-3)
    assert out.shape == (batch, output_size)

    print("KERNEL_OK")
</pallas_src>

<mosaic_0001>
module attributes {stable_mosaic.version = 11 : i64} {
  func.func @kernel(%arg0: i32, %arg1: memref<56x128xbf16, #tpu.memory_space<vmem>>, %arg2: memref<128x128xbf16, #tpu.memory_space<vmem>>, %arg3: memref<1x128xf32, #tpu.memory_space<vmem>>, %arg4: memref<128x128xbf16, #tpu.memory_space<vmem>>, %arg5: memref<1x128xf32, #tpu.memory_space<vmem>>, %arg6: memref<128x128xbf16, #tpu.memory_space<vmem>>, %arg7: memref<1x128xf32, #tpu.memory_space<vmem>>, %arg8: memref<128x128xbf16, #tpu.memory_space<vmem>>, %arg9: memref<1x128xf32, #tpu.memory_space<vmem>>, %arg10: memref<56x128xf32, #tpu.memory_space<vmem>>) attributes {dimension_semantics = [#tpu.dimension_semantics<parallel>], iteration_bounds = array<i64: 2>, scalar_prefetch = 0 : i64, scratch_operands = 0 : i64, tpu.core_type = #tpu.core_type<tc>, window_params = [{transform_indices = @transform_0, window_bounds = array<i64: 56, 128>}, {pipeline_mode = #tpu.pipeline_mode<synchronous>, transform_indices = @transform_1, window_bounds = array<i64: 128, 128>}, {pipeline_mode = #tpu.pipeline_mode<synchronous>, transform_indices = @transform_2, window_bounds = array<i64: 1, 128>}, {pipeline_mode = #tpu.pipeline_mode<synchronous>, transform_indices = @transform_3, window_bounds = array<i64: 128, 128>}, {pipeline_mode = #tpu.pipeline_mode<synchronous>, transform_indices = @transform_4, window_bounds = array<i64: 1, 128>}, {pipeline_mode = #tpu.pipeline_mode<synchronous>, transform_indices = @transform_5, window_bounds = array<i64: 128, 128>}, {pipeline_mode = #tpu.pipeline_mode<synchronous>, transform_indices = @transform_6, window_bounds = array<i64: 1, 128>}, {pipeline_mode = #tpu.pipeline_mode<synchronous>, transform_indices = @transform_7, window_bounds = array<i64: 128, 128>}, {pipeline_mode = #tpu.pipeline_mode<synchronous>, transform_indices = @transform_8, window_bounds = array<i64: 1, 128>}, {transform_indices = @transform_9, window_bounds = array<i64: 56, 128>}]} {
    %c0 = arith.constant 0 : index
    %c0_0 = arith.constant 0 : index
    %0 = vector.load %arg1[%c0, %c0_0] : memref<56x128xbf16, #tpu.memory_space<vmem>>, vector<56x128xbf16>
    %c0_1 = arith.constant 0 : index
    %c0_2 = arith.constant 0 : index
    %1 = vector.load %arg2[%c0_1, %c0_2] : memref<128x128xbf16, #tpu.memory_space<vmem>>, vector<128x128xbf16>
    %cst = arith.constant dense<0.000000e+00> : vector<56x128xf32>
    %2 = tpu.matmul %0, %1, %cst {dimension_numbers = #tpu.dot_dimension_numbers<[1], [0], [0], [1], [0, 0, 1, 1], [], []>} : vector<56x128xbf16>, vector<128x128xbf16>, vector<56x128xf32> -> vector<56x128xf32>
    %c0_3 = arith.constant 0 : index
    %c0_4 = arith.constant 0 : index
    %3 = vector.load %arg3[%c0_3, %c0_4] : memref<1x128xf32, #tpu.memory_space<vmem>>, vector<1x128xf32>
    %4 = vector.broadcast %3 : vector<1x128xf32> to vector<56x128xf32>
    %5 = arith.addf %2, %4 : vector<56x128xf32>
    %cst_5 = arith.constant 0.000000e+00 : f32
    %6 = vector.broadcast %cst_5 : f32 to vector<56x128xf32>
    %7 = arith.maximumf %5, %6 : vector<56x128xf32>
    %8 = arith.truncf %7 : vector<56x128xf32> to vector<56x128xbf16>
    %c0_6 = arith.constant 0 : index
    %c0_7 = arith.constant 0 : index
    %9 = vector.load %arg4[%c0_6, %c0_7] : memref<128x128xbf16, #tpu.memory_space<vmem>>, vector<128x128xbf16>
    %cst_8 = arith.constant dense<0.000000e+00> : vector<56x128xf32>
    %10 = tpu.matmul %8, %9, %cst_8 {dimension_numbers = #tpu.dot_dimension_numbers<[1], [0], [0], [1], [0, 0, 1, 1], [], []>} : vector<56x128xbf16>, vector<128x128xbf16>, vector<56x128xf32> -> vector<56x128xf32>
    %c0_9 = arith.constant 0 : index
    %c0_10 = arith.constant 0 : index
    %11 = vector.load %arg5[%c0_9, %c0_10] : memref<1x128xf32, #tpu.memory_space<vmem>>, vector<1x128xf32>
    %12 = vector.broadcast %11 : vector<1x128xf32> to vector<56x128xf32>
    %13 = arith.addf %10, %12 : vector<56x128xf32>
    %14 = arith.addf %13, %7 : vector<56x128xf32>
    %cst_11 = arith.constant 0.000000e+00 : f32
    %15 = vector.broadcast %cst_11 : f32 to vector<56x128xf32>
    %16 = arith.maximumf %14, %15 : vector<56x128xf32>
    %17 = arith.truncf %16 : vector<56x128xf32> to vector<56x128xbf16>
    %c0_12 = arith.constant 0 : index
    %c0_13 = arith.constant 0 : index
    %18 = vector.load %arg6[%c0_12, %c0_13] : memref<128x128xbf16, #tpu.memory_space<vmem>>, vector<128x128xbf16>
    %cst_14 = arith.constant dense<0.000000e+00> : vector<56x128xf32>
    %19 = tpu.matmul %17, %18, %cst_14 {dimension_numbers = #tpu.dot_dimension_numbers<[1], [0], [0], [1], [0, 0, 1, 1], [], []>} : vector<56x128xbf16>, vector<128x128xbf16>, vector<56x128xf32> -> vector<56x128xf32>
    %c0_15 = arith.constant 0 : index
    %c0_16 = arith.constant 0 : index
    %20 = vector.load %arg7[%c0_15, %c0_16] : memref<1x128xf32, #tpu.memory_space<vmem>>, vector<1x128xf32>
    %21 = vector.broadcast %20 : vector<1x128xf32> to vector<56x128xf32>
    %22 = arith.addf %19, %21 : vector<56x128xf32>
    %cst_17 = arith.constant 0.000000e+00 : f32
    %23 = vector.broadcast %cst_17 : f32 to vector<56x128xf32>
    %24 = arith.maximumf %22, %23 : vector<56x128xf32>
    %25 = arith.truncf %24 : vector<56x128xf32> to vector<56x128xbf16>
    %c0_18 = arith.constant 0 : index
    %c0_19 = arith.constant 0 : index
    %26 = vector.load %arg8[%c0_18, %c0_19] : memref<128x128xbf16, #tpu.memory_space<vmem>>, vector<128x128xbf16>
    %cst_20 = arith.constant dense<0.000000e+00> : vector<56x128xf32>
    %27 = tpu.matmul %25, %26, %cst_20 {dimension_numbers = #tpu.dot_dimension_numbers<[1], [0], [0], [1], [0, 0, 1, 1], [], []>} : vector<56x128xbf16>, vector<128x128xbf16>, vector<56x128xf32> -> vector<56x128xf32>
    %c0_21 = arith.constant 0 : index
    %c0_22 = arith.constant 0 : index
    %28 = vector.load %arg9[%c0_21, %c0_22] : memref<1x128xf32, #tpu.memory_space<vmem>>, vector<1x128xf32>
    %29 = vector.broadcast %28 : vector<1x128xf32> to vector<56x128xf32>
    %30 = arith.addf %27, %29 : vector<56x128xf32>
    %c0_23 = arith.constant 0 : index
    %c0_24 = arith.constant 0 : index
    %31 = vector.load %arg10[%c0_23, %c0_24] : memref<56x128xf32, #tpu.memory_space<vmem>>, vector<56x128xf32>
    tpu.vector_store %arg10[%c0_23, %c0_24], %30 {strides = array<i32>} : memref<56x128xf32, #tpu.memory_space<vmem>>, vector<56x128xf32>,
    return
  }
  func.func @transform_0(%arg0: i32) -> (i32, i32) {
    %c0_i32 = arith.constant 0 : i32
    %c0_i32_0 = arith.constant 0 : i32
    return %arg0, %c0_i32 : i32, i32
  }
  func.func @transform_1(%arg0: i32) -> (i32, i32) {
    %c0_i32 = arith.constant 0 : i32
    %c0_i32_0 = arith.constant 0 : i32
    %c0_i32_1 = arith.constant 0 : i32
    return %c0_i32, %c0_i32_0 : i32, i32
  }
  func.func @transform_2(%arg0: i32) -> (i32, i32) {
    %c0_i32 = arith.constant 0 : i32
    %c0_i32_0 = arith.constant 0 : i32
    %c0_i32_1 = arith.constant 0 : i32
    return %c0_i32, %c0_i32_0 : i32, i32
  }
  func.func @transform_3(%arg0: i32) -> (i32, i32) {
    %c0_i32 = arith.constant 0 : i32
    %c0_i32_0 = arith.constant 0 : i32
    %c0_i32_1 = arith.constant 0 : i32
    return %c0_i32, %c0_i32_0 : i32, i32
  }
  func.func @transform_4(%arg0: i32) -> (i32, i32) {
    %c0_i32 = arith.constant 0 : i32
    %c0_i32_0 = arith.constant 0 : i32
    %c0_i32_1 = arith.constant 0 : i32
    return %c0_i32, %c0_i32_0 : i32, i32
  }
  func.func @transform_5(%arg0: i32) -> (i32, i32) {
    %c0_i32 = arith.constant 0 : i32
    %c0_i32_0 = arith.constant 0 : i32
    %c0_i32_1 = arith.constant 0 : i32
    return %c0_i32, %c0_i32_0 : i32, i32
  }
  func.func @transform_6(%arg0: i32) -> (i32, i32) {
    %c0_i32 = arith.constant 0 : i32
    %c0_i32_0 = arith.constant 0 : i32
    %c0_i32_1 = arith.constant 0 : i32
    return %c0_i32, %c0_i32_0 : i32, i32
  }
  func.func @transform_7(%arg0: i32) -> (i32, i32) {
    %c0_i32 = arith.constant 0 : i32
    %c0_i32_0 = arith.constant 0 : i32
    %c0_i32_1 = arith.constant 0 : i32
    return %c0_i32, %c0_i32_0 : i32, i32
  }
  func.func @transform_8(%arg0: i32) -> (i32, i32) {
    %c0_i32 = arith.constant 0 : i32
    %c0_i32_0 = arith.constant 0 : i32
    %c0_i32_1 = arith.constant 0 : i32
    return %c0_i32, %c0_i32_0 : i32, i32
  }
  func.func @transform_9(%arg0: i32) -> (i32, i32) {
    %c0_i32 = arith.constant 0 : i32
    %c0_i32_0 = arith.constant 0 : i32
    return %arg0, %c0_i32 : i32, i32
  }
}

module attributes {stable_mosaic.version = 11 : i64} {
  func.func @kernel(%arg0: i32, %arg1: memref<56x128xbf16, #tpu.memory_space<vmem>>, %arg2: memref<128x128xbf16, #tpu.memory_space<vmem>>, %arg3: memref<1x128xf32, #tpu.memory_space<vmem>>, %arg4: memref<128x128xbf16, #tpu.memory_space<vmem>>, %arg5: memref<1x128xf32, #tpu.memory_space<vmem>>, %arg6: memref<128x128xbf16, #tpu.memory_space<vmem>>, %arg7: memref<1x128xf32, #tpu.memory_space<vmem>>, %arg8: memref<128x128xbf16, #tpu.memory_space<vmem>>, %arg9: memref<1x128xf32, #tpu.memory_space<vmem>>, %arg10: memref<56x128xf32, #tpu.memory_space<vmem>>) attributes {dimension_semantics = [#tpu.dimension_semantics<parallel>], iteration_bounds = array<i64: 2>, scalar_prefetch = 0 : i64, scratch_operands = 0 : i64, tpu.core_type = #tpu.core_type<tc>, window_params = [{transform_indices = @transform_0, window_bounds = array<i64: 56, 128>}, {pipeline_mode = #tpu.pipeline_mode<synchronous>, transform_indices = @transform_1, window_bounds = array<i64: 128, 128>}, {pipeline_mode = #tpu.pipeline_mode<synchronous>, transform_indices = @transform_2, window_bounds = array<i64: 1, 128>}, {pipeline_mode = #tpu.pipeline_mode<synchronous>, transform_indices = @transform_3, window_bounds = array<i64: 128, 128>}, {pipeline_mode = #tpu.pipeline_mode<synchronous>, transform_indices = @transform_4, window_bounds = array<i64: 1, 128>}, {pipeline_mode = #tpu.pipeline_mode<synchronous>, transform_indices = @transform_5, window_bounds = array<i64: 128, 128>}, {pipeline_mode = #tpu.pipeline_mode<synchronous>, transform_indices = @transform_6, window_bounds = array<i64: 1, 128>}, {pipeline_mode = #tpu.pipeline_mode<synchronous>, transform_indices = @transform_7, window_bounds = array<i64: 128, 128>}, {pipeline_mode = #tpu.pipeline_mode<synchronous>, transform_indices = @transform_8, window_bounds = array<i64: 1, 128>}, {transform_indices = @transform_9, window_bounds = array<i64: 56, 128>}]} {
    %c0 = arith.constant 0 : index
    %c0_0 = arith.constant 0 : index
    %0 = vector.load %arg1[%c0, %c0_0] : memref<56x128xbf16, #tpu.memory_space<vmem>>, vector<56x128xbf16>
    %c0_1 = arith.constant 0 : index
    %c0_2 = arith.constant 0 : index
    %1 = vector.load %arg2[%c0_1, %c0_2] : memref<128x128xbf16, #tpu.memory_space<vmem>>, vector<128x128xbf16>
    %cst = arith.constant dense<0.000000e+00> : vector<56x128xf32>
    %2 = tpu.matmul %0, %1, %cst {dimension_numbers = #tpu.dot_dimension_numbers<[1], [0], [0], [1], [0, 0, 1, 1], [], []>} : vector<56x128xbf16>, vector<128x128xbf16>, vector<56x128xf32> -> vector<56x128xf32>
    %c0_3 = arith.constant 0 : index
    %c0_4 = arith.constant 0 : index
    %3 = vector.load %arg3[%c0_3, %c0_4] : memref<1x128xf32, #tpu.memory_space<vmem>>, vector<1x128xf32>
    %4 = vector.broadcast %3 : vector<1x128xf32> to vector<56x128xf32>
    %5 = arith.addf %2, %4 : vector<56x128xf32>
    %cst_5 = arith.constant 0.000000e+00 : f32
    %6 = vector.broadcast %cst_5 : f32 to vector<56x128xf32>
    %7 = arith.maximumf %5, %6 : vector<56x128xf32>
    %8 = arith.truncf %7 : vector<56x128xf32> to vector<56x128xbf16>
    %c0_6 = arith.constant 0 : index
    %c0_7 = arith.constant 0 : index
    %9 = vector.load %arg4[%c0_6, %c0_7] : memref<128x128xbf16, #tpu.memory_space<vmem>>, vector<128x128xbf16>
    %cst_8 = arith.constant dense<0.000000e+00> : vector<56x128xf32>
    %10 = tpu.matmul %8, %9, %cst_8 {dimension_numbers = #tpu.dot_dimension_numbers<[1], [0], [0], [1], [0, 0, 1, 1], [], []>} : vector<56x128xbf16>, vector<128x128xbf16>, vector<56x128xf32> -> vector<56x128xf32>
    %c0_9 = arith.constant 0 : index
    %c0_10 = arith.constant 0 : index
    %11 = vector.load %arg5[%c0_9, %c0_10] : memref<1x128xf32, #tpu.memory_space<vmem>>, vector<1x128xf32>
    %12 = vector.broadcast %11 : vector<1x128xf32> to vector<56x128xf32>
    %13 = arith.addf %10, %12 : vector<56x128xf32>
    %14 = arith.addf %13, %7 : vector<56x128xf32>
    %cst_11 = arith.constant 0.000000e+00 : f32
    %15 = vector.broadcast %cst_11 : f32 to vector<56x128xf32>
    %16 = arith.maximumf %14, %15 : vector<56x128xf32>
    %17 = arith.truncf %16 : vector<56x128xf32> to vector<56x128xbf16>
    %c0_12 = arith.constant 0 : index
    %c0_13 = arith.constant 0 : index
    %18 = vector.load %arg6[%c0_12, %c0_13] : memref<128x128xbf16, #tpu.memory_space<vmem>>, vector<128x128xbf16>
    %cst_14 = arith.constant dense<0.000000e+00> : vector<56x128xf32>
    %19 = tpu.matmul %17, %18, %cst_14 {dimension_numbers = #tpu.dot_dimension_numbers<[1], [0], [0], [1], [0, 0, 1, 1], [], []>} : vector<56x128xbf16>, vector<128x128xbf16>, vector<56x128xf32> -> vector<56x128xf32>
    %c0_15 = arith.constant 0 : index
    %c0_16 = arith.constant 0 : index
    %20 = vector.load %arg7[%c0_15, %c0_16] : memref<1x128xf32, #tpu.memory_space<vmem>>, vector<1x128xf32>
    %21 = vector.broadcast %20 : vector<1x128xf32> to vector<56x128xf32>
    %22 = arith.addf %19, %21 : vector<56x128xf32>
    %cst_17 = arith.constant 0.000000e+00 : f32
    %23 = vector.broadcast %cst_17 : f32 to vector<56x128xf32>
    %24 = arith.maximumf %22, %23 : vector<56x128xf32>
    %25 = arith.truncf %24 : vector<56x128xf32> to vector<56x128xbf16>
    %c0_18 = arith.constant 0 : index
    %c0_19 = arith.constant 0 : index
    %26 = vector.load %arg8[%c0_18, %c0_19] : memref<128x128xbf16, #tpu.memory_space<vmem>>, vector<128x128xbf16>
    %cst_20 = arith.constant dense<0.000000e+00> : vector<56x128xf32>
    %27 = tpu.matmul %25, %26, %cst_20 {dimension_numbers = #tpu.dot_dimension_numbers<[1], [0], [0], [1], [0, 0, 1, 1], [], []>} : vector<56x128xbf16>, vector<128x128xbf16>, vector<56x128xf32> -> vector<56x128xf32>
    %c0_21 = arith.constant 0 : index
    %c0_22 = arith.constant 0 : index
    %28 = vector.load %arg9[%c0_21, %c0_22] : memref<1x128xf32, #tpu.memory_space<vmem>>, vector<1x128xf32>
    %29 = vector.broadcast %28 : vector<1x128xf32> to vector<56x128xf32>
    %30 = arith.addf %27, %29 : vector<56x128xf32>
    %c0_23 = arith.constant 0 : index
    %c0_24 = arith.constant 0 : index
    %31 = vector.load %arg10[%c0_23, %c0_24] : memref<56x128xf32, #tpu.memory_space<vmem>>, vector<56x128xf32>
    tpu.vector_store %arg10[%c0_23, %c0_24], %30 {strides = array<i32>} : memref<56x128xf32, #tpu.memory_space<vmem>>, vector<56x128xf32>,
    return
  }
  func.func @transform_0(%arg0: i32) -> (i32, i32) {
    %c0_i32 = arith.constant 0 : i32
    %c0_i32_0 = arith.constant 0 : i32
    return %arg0, %c0_i32 : i32, i32
  }
  func.func @transform_1(%arg0: i32) -> (i32, i32) {
    %c0_i32 = arith.constant 0 : i32
    %c0_i32_0 = arith.constant 0 : i32
    %c0_i32_1 = arith.constant 0 : i32
    return %c0_i32, %c0_i32_0 : i32, i32
  }
  func.func @transform_2(%arg0: i32) -> (i32, i32) {
    %c0_i32 = arith.constant 0 : i32
    %c0_i32_0 = arith.constant 0 : i32
    %c0_i32_1 = arith.constant 0 : i32
    return %c0_i32, %c0_i32_0 : i32, i32
  }
  func.func @transform_3(%arg0: i32) -> (i32, i32) {
    %c0_i32 = arith.constant 0 : i32
    %c0_i32_0 = arith.constant 0 : i32
    %c0_i32_1 = arith.constant 0 : i32
    return %c0_i32, %c0_i32_0 : i32, i32
  }
  func.func @transform_4(%arg0: i32) -> (i32, i32) {
    %c0_i32 = arith.constant 0 : i32
    %c0_i32_0 = arith.constant 0 : i32
    %c0_i32_1 = arith.constant 0 : i32
    return %c0_i32, %c0_i32_0 : i32, i32
  }
  func.func @transform_5(%arg0: i32) -> (i32, i32) {
    %c0_i32 = arith.constant 0 : i32
    %c0_i32_0 = arith.constant 0 : i32
    %c0_i32_1 = arith.constant 0 : i32
    return %c0_i32, %c0_i32_0 : i32, i32
  }
  func.func @transform_6(%arg0: i32) -> (i32, i32) {
    %c0_i32 = arith.constant 0 : i32
    %c0_i32_0 = arith.constant 0 : i32
    %c0_i32_1 = arith.constant 0 : i32
    return %c0_i32, %c0_i32_0 : i32, i32
  }
  func.func @transform_7(%arg0: i32) -> (i32, i32) {
    %c0_i32 = arith.constant 0 : i32
    %c0_i32_0 = arith.constant 0 : i32
    %c0_i32_1 = arith.constant 0 : i32
    return %c0_i32, %c0_i32_0 : i32, i32
  }
  func.func @transform_8(%arg0: i32) -> (i32, i32) {
    %c0_i32 = arith.constant 0 : i32
    %c0_i32_0 = arith.constant 0 : i32
    %c0_i32_1 = arith.constant 0 : i32
    return %c0_i32, %c0_i32_0 : i32, i32
  }
  func.func @transform_9(%arg0: i32) -> (i32, i32) {
    %c0_i32 = arith.constant 0 : i32
    %c0_i32_0 = arith.constant 0 : i32
    return %arg0, %c0_i32 : i32, i32
  }
}

</mosaic_0001>

<llo_original>
// kernel: tpu_custom_call.1
$region0: #{tpu_custom_call.1}
  #allocation0 [shape = 'u32[]', space=smem, size = 0x4, offset = 0x4, fixed_abs, tag = 'smem constant byte address 0x4 - core index']
  #allocation1 [shape = 'u32[144,128]{1,0:T(1,128)}', space=vmem, size = 0x12000, scoped, tag = 'internal scratch']
  %s0 = inlined_call_operand.hbm [shape: bf16[112,128], index: 0, kind: input, shape index: {}]
  %s1 = inlined_call_operand.hbm [shape: bf16[128,128], index: 1, kind: input, shape index: {}]
  %s2 = inlined_call_operand.vmem [shape: f32[1,128], index: 2, kind: input, shape index: {}]
  %s3 = inlined_call_operand.hbm [shape: bf16[128,128], index: 3, kind: input, shape index: {}]
  %s4 = inlined_call_operand.vmem [shape: f32[1,128], index: 4, kind: input, shape index: {}]
  %s5 = inlined_call_operand.hbm [shape: bf16[128,128], index: 5, kind: input, shape index: {}]
  %s6 = inlined_call_operand.vmem [shape: f32[1,128], index: 6, kind: input, shape index: {}]
  %s7 = inlined_call_operand.hbm [shape: bf16[128,128], index: 7, kind: input, shape index: {}]
  %s8 = inlined_call_operand.vmem [shape: f32[1,128], index: 8, kind: input, shape index: {}]
  %s9 = inlined_call_operand.hbm [shape: f32[112,128], index: 9, kind: output, shape index: {}]
  %s10 = sld [smem:[#allocation0]]
  $region89: #{tpu_custom_call.1} parent=0
    _
  %s12 = ssub.s32 1, %s10
  %s13 = scalar_select 0, %s12, %s10
  $region1: #{tpu_custom_call.1} parent=0
    #allocation2 [shape = 'u8[28672]{0}', space=vmem, size = 0x7000, scoped, tag = 'input window, operand 0']
    #allocation3 [shape = 's32[2]{0}', space=sflag, size = 0x8, scoped, tag = 'scoped memory for tpu_custom_call.1']
    #allocation4 [shape = 's32[2]{0}', space=sflag, size = 0x8, scoped, tag = 'scoped memory for tpu_custom_call.1']
    #allocation5 [shape = 'u8[32768]{0}', space=vmem, size = 0x8000, scoped, tag = 'input window, operand 1, single buffered']
    #allocation6 [shape = 's32[1]{0}', space=sflag, size = 0x4, scoped, tag = 'scoped memory for tpu_custom_call.1']
    #allocation7 [shape = 'u8[32768]{0}', space=vmem, size = 0x8000, scoped, tag = 'input window, operand 3, single buffered']
    #allocation8 [shape = 'u8[32768]{0}', space=vmem, size = 0x8000, scoped, tag = 'input window, operand 5, single buffered']
    #allocation9 [shape = 's32[1]{0}', space=sflag, size = 0x4, scoped, tag = 'scoped memory for tpu_custom_call.1']
    #allocation10 [shape = 'u8[32768]{0}', space=vmem, size = 0x8000, scoped, tag = 'input window, operand 7, single buffered']
    #allocation11 [shape = 'u8[57344]{0}', space=vmem, size = 0xe000, scoped, tag = 'output window, operand 0']
    %14 = vsyncpa [#allocation3], 0
    %s15 = scalar_lea.sflag [#allocation3], 1
    %16 = vsyncpa %s15, 0
    %17 = vsyncpa [#allocation6], 0
    %18 = vsyncpa [#allocation9], 0
    %19 = vsyncpa [#allocation4], 0
    %s20 = scalar_lea.sflag [#allocation4], 1
    %21 = vsyncpa %s20, 0
    loop: start=0, step=1, limit=4
    $region2: #{tpu_custom_call.1} parent=1 // loop_pre_header
      _
    $region3: #{tpu_custom_call.1} parent=1 // loop_header
      %s23 = sphi 0, %s27
      %p24 = scmp.ge.s32.totalorder %s23, 4
      %s33 = sphi 0, %s35
      %s36 = sphi 0, %s33
      %s37 = sphi 0, %s36
      %s53 = sphi 0, %s37
      %s57 = sphi 0, %s57
      %s59 = sphi 0, %s57
      %s60 = sphi 0, %s59
      %s74 = sphi 0, %s60
      %s78 = sphi 0, %s78
      %s80 = sphi 0, %s78
      %s81 = sphi 0, %s80
      %s95 = sphi 0, %s81
      %s99 = sphi 0, %s99
      %s101 = sphi 0, %s99
      %s102 = sphi 0, %s101
      %s116 = sphi 0, %s102
      %s120 = sphi 0, %s120
      %s122 = sphi 0, %s120
      %s123 = sphi 0, %s122
      %s137 = sphi 0, %s123
      %s141 = sphi 0, %s141
      %s143 = sphi 0, %s141
      %s144 = sphi 0, %s143
      %s158 = sphi 0, %s144
      %s162 = sphi 0, %s162
      %s164 = sphi 0, %s162
      %s165 = sphi 0, %s164
      %s179 = sphi 0, %s165
      %s183 = sphi 0, %s183
      %s185 = sphi 0, %s183
      %s186 = sphi 0, %s185
      %s200 = sphi 0, %s186
      %s204 = sphi 0, %s204
      %s206 = sphi 0, %s204
      %s207 = sphi 0, %s206
      %s221 = sphi 0, %s207
      %s227 = sphi 0, %s229
      %s230 = sphi 0, %s227
      %s231 = sphi 0, %s230
      %s247 = sphi 0, %s231
    $region4: #{tpu_custom_call.1} parent=1 // loop_header_branch
      %26 = sbr.rel (%p24) target = $region8
    $region5: #{tpu_custom_call.1} parent=1 // loop_body
      %s28 = ssub.s32 %s23, 1
      %s29 = ssub.s32 %s23, 2
      %s30 = sadd.s32 %s23, 1
      %s31 = ssub.s32 %s23, %s30
      %p32 = scmp.eq.s32.totalorder %s31, 0
      %s34 = sadd.s32 %s33, 1
      %s35 = scalar_select %p32, %s33, %s34
      %p38 = pneg %p32
      %p39 = scmp.eq.s32.totalorder %s23, 1
      %p40 = por %p38, %p39
      %p41 = scmp.ne.s32.totalorder %s33, %s36
      %p42 = scmp.eq.s32.totalorder %s23, 0
      %p43 = por %p41, %p42
      %p44 = scmp.ne.s32.totalorder %s33, %s36
      %p45 = scmp.eq.s32.totalorder %s28, 1
      %p46 = por %p44, %p45
      %p47 = scmp.ne.s32.totalorder %s36, %s37
      %p48 = scmp.eq.s32.totalorder %s28, 0
      %p49 = por %p47, %p48
      %p50 = scmp.ne.s32.totalorder %s36, %s37
      %p51 = scmp.eq.s32.totalorder %s29, 1
      %p52 = por %p50, %p51
      %p54 = scmp.ne.s32.totalorder %s37, %s53
      %p55 = scmp.eq.s32.totalorder %s29, 0
      %p56 = por %p54, %p55
      %s58 = sadd.s32 %s57, 1
      %p61 = scmp.eq.s32.totalorder %s23, 1
      %p62 = scmp.ne.s32.totalorder %s57, %s59
      %p63 = scmp.eq.s32.totalorder %s23, 0
      %p64 = por %p62, %p63
      %p65 = scmp.ne.s32.totalorder %s57, %s59
      %p66 = scmp.eq.s32.totalorder %s28, 1
      %p67 = por %p65, %p66
      %p68 = scmp.ne.s32.totalorder %s59, %s60
      %p69 = scmp.eq.s32.totalorder %s28, 0
      %p70 = por %p68, %p69
      %p71 = scmp.ne.s32.totalorder %s59, %s60
      %p72 = scmp.eq.s32.totalorder %s29, 1
      %p73 = por %p71, %p72
      %p75 = scmp.ne.s32.totalorder %s60, %s74
      %p76 = scmp.eq.s32.totalorder %s29, 0
      %p77 = por %p75, %p76
      %s79 = sadd.s32 %s78, 1
      %p82 = scmp.eq.s32.totalorder %s23, 1
      %p83 = scmp.ne.s32.totalorder %s78, %s80
      %p84 = scmp.eq.s32.totalorder %s23, 0
      %p85 = por %p83, %p84
      %p86 = scmp.ne.s32.totalorder %s78, %s80
      %p87 = scmp.eq.s32.totalorder %s28, 1
      %p88 = por %p86, %p87
      %p89 = scmp.ne.s32.totalorder %s80, %s81
      %p90 = scmp.eq.s32.totalorder %s28, 0
      %p91 = por %p89, %p90
      %p92 = scmp.ne.s32.totalorder %s80, %s81
      %p93 = scmp.eq.s32.totalorder %s29, 1
      %p94 = por %p92, %p93
      %p96 = scmp.ne.s32.totalorder %s81, %s95
      %p97 = scmp.eq.s32.totalorder %s29, 0
      %p98 = por %p96, %p97
      %s100 = sadd.s32 %s99, 1
      %p103 = scmp.eq.s32.totalorder %s23, 1
      %p104 = scmp.ne.s32.totalorder %s99, %s101
      %p105 = scmp.eq.s32.totalorder %s23, 0
      %p106 = por %p104, %p105
      %p107 = scmp.ne.s32.totalorder %s99, %s101
      %p108 = scmp.eq.s32.totalorder %s28, 1
      %p109 = por %p107, %p108
      %p110 = scmp.ne.s32.totalorder %s101, %s102
      %p111 = scmp.eq.s32.totalorder %s28, 0
      %p112 = por %p110, %p111
      %p113 = scmp.ne.s32.totalorder %s101, %s102
      %p114 = scmp.eq.s32.totalorder %s29, 1
      %p115 = por %p113, %p114
      %p117 = scmp.ne.s32.totalorder %s102, %s116
      %p118 = scmp.eq.s32.totalorder %s29, 0
      %p119 = por %p117, %p118
      %s121 = sadd.s32 %s120, 1
      %p124 = scmp.eq.s32.totalorder %s23, 1
      %p125 = scmp.ne.s32.totalorder %s120, %s122
      %p126 = scmp.eq.s32.totalorder %s23, 0
      %p127 = por %p125, %p126
      %p128 = scmp.ne.s32.totalorder %s120, %s122
      %p129 = scmp.eq.s32.totalorder %s28, 1
      %p130 = por %p128, %p129
      %p131 = scmp.ne.s32.totalorder %s122, %s123
      %p132 = scmp.eq.s32.totalorder %s28, 0
      %p133 = por %p131, %p132
      %p134 = scmp.ne.s32.totalorder %s122, %s123
      %p135 = scmp.eq.s32.totalorder %s29, 1
      %p136 = por %p134, %p135
      %p138 = scmp.ne.s32.totalorder %s123, %s137
      %p139 = scmp.eq.s32.totalorder %s29, 0
      %p140 = por %p138, %p139
      %s142 = sadd.s32 %s141, 1
      %p145 = scmp.eq.s32.totalorder %s23, 1
      %p146 = scmp.ne.s32.totalorder %s141, %s143
      %p147 = scmp.eq.s32.totalorder %s23, 0
      %p148 = por %p146, %p147
      %p149 = scmp.ne.s32.totalorder %s141, %s143
      %p150 = scmp.eq.s32.totalorder %s28, 1
      %p151 = por %p149, %p150
      %p152 = scmp.ne.s32.totalorder %s143, %s144
      %p153 = scmp.eq.s32.totalorder %s28, 0
      %p154 = por %p152, %p153
      %p155 = scmp.ne.s32.totalorder %s143, %s144
      %p156 = scmp.eq.s32.totalorder %s29, 1
      %p157 = por %p155, %p156
      %p159 = scmp.ne.s32.totalorder %s144, %s158
      %p160 = scmp.eq.s32.totalorder %s29, 0
      %p161 = por %p159, %p160
      %s163 = sadd.s32 %s162, 1
      %p166 = scmp.eq.s32.totalorder %s23, 1
      %p167 = scmp.ne.s32.totalorder %s162, %s164
      %p168 = scmp.eq.s32.totalorder %s23, 0
      %p169 = por %p167, %p168
      %p170 = scmp.ne.s32.totalorder %s162, %s164
      %p171 = scmp.eq.s32.totalorder %s28, 1
      %p172 = por %p170, %p171
      %p173 = scmp.ne.s32.totalorder %s164, %s165
      %p174 = scmp.eq.s32.totalorder %s28, 0
      %p175 = por %p173, %p174
      %p176 = scmp.ne.s32.totalorder %s164, %s165
      %p177 = scmp.eq.s32.totalorder %s29, 1
      %p178 = por %p176, %p177
      %p180 = scmp.ne.s32.totalorder %s165, %s179
      %p181 = scmp.eq.s32.totalorder %s29, 0
      %p182 = por %p180, %p181
      %s184 = sadd.s32 %s183, 1
      %p187 = scmp.eq.s32.totalorder %s23, 1
      %p188 = scmp.ne.s32.totalorder %s183, %s185
      %p189 = scmp.eq.s32.totalorder %s23, 0
      %p190 = por %p188, %p189
      %p191 = scmp.ne.s32.totalorder %s183, %s185
      %p192 = scmp.eq.s32.totalorder %s28, 1
      %p193 = por %p191, %p192
      %p194 = scmp.ne.s32.totalorder %s185, %s186
      %p195 = scmp.eq.s32.totalorder %s28, 0
      %p196 = por %p194, %p195
      %p197 = scmp.ne.s32.totalorder %s185, %s186
      %p198 = scmp.eq.s32.totalorder %s29, 1
      %p199 = por %p197, %p198
      %p201 = scmp.ne.s32.totalorder %s186, %s200
      %p202 = scmp.eq.s32.totalorder %s29, 0
      %p203 = por %p201, %p202
      %s205 = sadd.s32 %s204, 1
      %p208 = scmp.eq.s32.totalorder %s23, 1
      %p209 = scmp.ne.s32.totalorder %s204, %s206
      %p210 = scmp.eq.s32.totalorder %s23, 0
      %p211 = por %p209, %p210
      %p212 = scmp.ne.s32.totalorder %s204, %s206
      %p213 = scmp.eq.s32.totalorder %s28, 1
      %p214 = por %p212, %p213
      %p215 = scmp.ne.s32.totalorder %s206, %s207
      %p216 = scmp.eq.s32.totalorder %s28, 0
      %p217 = por %p215, %p216
      %p218 = scmp.ne.s32.totalorder %s206, %s207
      %p219 = scmp.eq.s32.totalorder %s29, 1
      %p220 = por %p218, %p219
      %p222 = scmp.ne.s32.totalorder %s207, %s221
      %p223 = scmp.eq.s32.totalorder %s29, 0
      %p224 = por %p222, %p223
      %s225 = ssub.s32 %s23, %s30
      %p226 = scmp.eq.s32.totalorder %s225, 0
      %s228 = sadd.s32 %s227, 1
      %s229 = scalar_select %p226, %s227, %s228
      %p232 = pneg %p226
      %p233 = scmp.eq.s32.totalorder %s23, 1
      %p234 = por %p232, %p233
      %p235 = scmp.ne.s32.totalorder %s227, %s230
      %p236 = scmp.eq.s32.totalorder %s23, 0
      %p237 = por %p235, %p236
      %p238 = scmp.ne.s32.totalorder %s227, %s230
      %p239 = scmp.eq.s32.totalorder %s28, 1
      %p240 = por %p238, %p239
      %p241 = scmp.ne.s32.totalorder %s230, %s231
      %p242 = scmp.eq.s32.totalorder %s28, 0
      %p243 = por %p241, %p242
      %p244 = scmp.ne.s32.totalorder %s230, %s231
      %p245 = scmp.eq.s32.totalorder %s29, 1
      %p246 = por %p244, %p245
      %p248 = scmp.ne.s32.totalorder %s231, %s247
      %p249 = scmp.eq.s32.totalorder %s29, 0
      %p250 = por %p248, %p249
      %p251 = scmp.le.s32.totalorder 1, %s23
      %p252 = scmp.lt.s32.totalorder %s23, 3
      %p253 = pnand %p251, %p252
      %p254 = pneg %p253
      // Predicated region
      $region9: #{tpu_custom_call.1} parent=5 // pred_check
        _
      $region10: #{tpu_custom_call.1} parent=5 // pred_check_branch
        %256 = sbr.rel (%p253) target = $region12
      $region11: #{tpu_custom_call.1} parent=5 // pred_region
        %s257 = ssub.s32 %s23, 1
        // Predicated region
        $region13: #{tpu_custom_call.1} parent=11 // pred_check
          %p258 = pneg %p70
        $region14: #{tpu_custom_call.1} parent=11 // pred_check_branch
          %260 = sbr.rel (%p258) target = $region16
        $region15: #{tpu_custom_call.1} parent=11 // pred_region
          %s262 = ssub.s32 1024, 1024
          %263 = vsyncadd [#allocation6], %s262
          %s264 = sshll.u32 [#allocation5], 4
          %s265 = int_to_ptr.vmem [resolvable:$true] %s264
          %270 = dma.hbm_to_vmem [thread:$0]  %s1, 1024, %s265, [#allocation6], 64, 64, 4
        $region16: #{tpu_custom_call.1} parent=11 // pred_fallthru
          _
        // Predicated region
        $region17: #{tpu_custom_call.1} parent=11 // pred_check
          %p271 = pneg %p91
        $region18: #{tpu_custom_call.1} parent=11 // pred_check_branch
          %273 = sbr.rel (%p271) target = $region20
        $region19: #{tpu_custom_call.1} parent=11 // pred_region
          _
        $region20: #{tpu_custom_call.1} parent=11 // pred_fallthru
          _
        // Predicated region
        $region21: #{tpu_custom_call.1} parent=11 // pred_check
          %p274 = pneg %p112
        $region22: #{tpu_custom_call.1} parent=11 // pred_check_branch
          %276 = sbr.rel (%p274) target = $region24
        $region23: #{tpu_custom_call.1} parent=11 // pred_region
          %s278 = ssub.s32 1024, 1024
          %279 = vsyncadd [#allocation6], %s278
          %s280 = sshll.u32 [#allocation7], 4
          %s281 = int_to_ptr.vmem [resolvable:$true] %s280
          %286 = dma.hbm_to_vmem [thread:$0]  %s3, 1024, %s281, [#allocation6], 64, 64, 4
        $region24: #{tpu_custom_call.1} parent=11 // pred_fallthru
          _
        // Predicated region
        $region25: #{tpu_custom_call.1} parent=11 // pred_check
          %p287 = pneg %p133
        $region26: #{tpu_custom_call.1} parent=11 // pred_check_branch
          %289 = sbr.rel (%p287) target = $region28
        $region27: #{tpu_custom_call.1} parent=11 // pred_region
          _
        $region28: #{tpu_custom_call.1} parent=11 // pred_fallthru
          _
        // Predicated region
        $region29: #{tpu_custom_call.1} parent=11 // pred_check
          %p290 = pneg %p154
        $region30: #{tpu_custom_call.1} parent=11 // pred_check_branch
          %292 = sbr.rel (%p290) target = $region32
        $region31: #{tpu_custom_call.1} parent=11 // pred_region
          %s294 = ssub.s32 1024, 1024
          %295 = vsyncadd [#allocation9], %s294
          %s296 = sshll.u32 [#allocation8], 4
          %s297 = int_to_ptr.vmem [resolvable:$true] %s296
          %302 = dma.hbm_to_vmem [thread:$0]  %s5, 1024, %s297, [#allocation9], 64, 64, 4
        $region32: #{tpu_custom_call.1} parent=11 // pred_fallthru
          _
        // Predicated region
        $region33: #{tpu_custom_call.1} parent=11 // pred_check
          %p303 = pneg %p175
        $region34: #{tpu_custom_call.1} parent=11 // pred_check_branch
          %305 = sbr.rel (%p303) target = $region36
        $region35: #{tpu_custom_call.1} parent=11 // pred_region
          _
        $region36: #{tpu_custom_call.1} parent=11 // pred_fallthru
          _
        // Predicated region
        $region37: #{tpu_custom_call.1} parent=11 // pred_check
          %p306 = pneg %p196
        $region38: #{tpu_custom_call.1} parent=11 // pred_check_branch
          %308 = sbr.rel (%p306) target = $region40
        $region39: #{tpu_custom_call.1} parent=11 // pred_region
          %s310 = ssub.s32 1024, 1024
          %311 = vsyncadd [#allocation9], %s310
          %s312 = sshll.u32 [#allocation10], 4
          %s313 = int_to_ptr.vmem [resolvable:$true] %s312
          %318 = dma.hbm_to_vmem [thread:$0]  %s7, 1024, %s313, [#allocation9], 64, 64, 4
        $region40: #{tpu_custom_call.1} parent=11 // pred_fallthru
          _
        // Predicated region
        $region41: #{tpu_custom_call.1} parent=11 // pred_check
          %p319 = pneg %p217
        $region42: #{tpu_custom_call.1} parent=11 // pred_check_branch
          %321 = sbr.rel (%p319) target = $region44
        $region43: #{tpu_custom_call.1} parent=11 // pred_region
          _
        $region44: #{tpu_custom_call.1} parent=11 // pred_fallthru
          _
      $region12: #{tpu_custom_call.1} parent=5 // pred_fallthru
        _
      %p322 = scmp.lt.s32.totalorder %s23, 2
      // Predicated region
      $region45: #{tpu_custom_call.1} parent=5 // pred_check
        %p323 = pneg %p322
      $region46: #{tpu_custom_call.1} parent=5 // pred_check_branch
        %325 = sbr.rel (%p323) target = $region48
      $region47: #{tpu_custom_call.1} parent=5 // pred_region
        // Predicated region
        $region49: #{tpu_custom_call.1} parent=47 // pred_check
          %p326 = pneg %p43
        $region50: #{tpu_custom_call.1} parent=47 // pred_check_branch
          %328 = sbr.rel (%p326) target = $region52
        $region51: #{tpu_custom_call.1} parent=47 // pred_region
          %s329 = sand.u32 %s33, 1
          %s330 = scalar_lea.sflag [#allocation3], %s329
          %s331 = sand.u32 %s33, 1
          %s332 = smul.addr %s331, 28
          %s333 = scalar_lea.vmem [#allocation2], %s332
          %s334 = smul.u32 7, %s23
          %s336 = ssub.s32 448, 448
          %337 = vsyncadd %s330, %s336
          %s338 = smul.addr %s334, 64
          %s339 = scalar_lea.hbm %s0, %s338
          %s340 = sshll.u32 %s333, 4
          %s341 = int_to_ptr.vmem [resolvable:$true] %s340
          %346 = dma.hbm_to_vmem [thread:$0]  %s339, 448, %s341, %s330, 64, 64, 4
        $region52: #{tpu_custom_call.1} parent=47 // pred_fallthru
          _
      $region48: #{tpu_custom_call.1} parent=5 // pred_fallthru
        _
      %p347 = scmp.le.s32.totalorder 1, %s23
      %p348 = scmp.lt.s32.totalorder %s23, 3
      %p349 = pnand %p347, %p348
      %p350 = pneg %p349
      // Predicated region
      $region53: #{tpu_custom_call.1} parent=5 // pred_check
        _
      $region54: #{tpu_custom_call.1} parent=5 // pred_check_branch
        %352 = sbr.rel (%p349) target = $region56
      $region55: #{tpu_custom_call.1} parent=5 // pred_region
        %s353 = ssub.s32 %s23, 1
        %s354 = sand.u32 %s36, 1
        %s355 = scalar_lea.sflag [#allocation3], %s354
        %s356 = sand.u32 %s36, 1
        %s357 = smul.addr %s356, 28
        %s358 = scalar_lea.vmem [#allocation2], %s357
        // Predicated region
        $region57: #{tpu_custom_call.1} parent=55 // pred_check
          %p359 = pneg %p49
        $region58: #{tpu_custom_call.1} parent=55 // pred_check_branch
          %361 = sbr.rel (%p359) target = $region60
        $region59: #{tpu_custom_call.1} parent=55 // pred_region
          %362 = dma.done %s355, 448
        $region60: #{tpu_custom_call.1} parent=55 // pred_fallthru
          _
        // Predicated region
        $region61: #{tpu_custom_call.1} parent=55 // pred_check
          %p363 = pneg %p70
        $region62: #{tpu_custom_call.1} parent=55 // pred_check_branch
          %365 = sbr.rel (%p363) target = $region64
        $region63: #{tpu_custom_call.1} parent=55 // pred_region
          %366 = dma.done [#allocation6], 1024
        $region64: #{tpu_custom_call.1} parent=55 // pred_fallthru
          _
        // Predicated region
        $region65: #{tpu_custom_call.1} parent=55 // pred_check
          %p367 = pneg %p112
        $region66: #{tpu_custom_call.1} parent=55 // pred_check_branch
          %369 = sbr.rel (%p367) target = $region68
        $region67: #{tpu_custom_call.1} parent=55 // pred_region
          %370 = dma.done [#allocation6], 1024
        $region68: #{tpu_custom_call.1} parent=55 // pred_fallthru
          _
        // Predicated region
        $region69: #{tpu_custom_call.1} parent=55 // pred_check
          %p371 = pneg %p154
        $region70: #{tpu_custom_call.1} parent=55 // pred_check_branch
          %373 = sbr.rel (%p371) target = $region72
        $region71: #{tpu_custom_call.1} parent=55 // pred_region
          %374 = dma.done [#allocation9], 1024
        $region72: #{tpu_custom_call.1} parent=55 // pred_fallthru
          _
        // Predicated region
        $region73: #{tpu_custom_call.1} parent=55 // pred_check
          %p375 = pneg %p196
        $region74: #{tpu_custom_call.1} parent=55 // pred_check_branch
          %377 = sbr.rel (%p375) target = $region76
        $region75: #{tpu_custom_call.1} parent=55 // pred_region
          %378 = dma.done [#allocation9], 1024
        $region76: #{tpu_custom_call.1} parent=55 // pred_fallthru
          _
        %s379 = sand.u32 %s36, 1
        %s380 = scalar_lea.sflag [#allocation3], %s379
        %s381 = sand.u32 %s36, 1
        %s382 = smul.addr %s381, 28
        %s383 = scalar_lea.vmem [#allocation2], %s382
        %p384 = pneg %p49
        %p385 = pneg %p46
        %p386 = pneg %p70
        %p387 = pneg %p67
        %p388 = pneg %p91
        %p389 = pneg %p88
        %p390 = pneg %p112
        %p391 = pneg %p109
        %p392 = pneg %p133
        %p393 = pneg %p130
        %p394 = pneg %p154
        %p395 = pneg %p151
        %p396 = pneg %p175
        %p397 = pneg %p172
        %p398 = pneg %p196
        %p399 = pneg %p193
        %p400 = pneg %p217
        %p401 = pneg %p214
        %p402 = pneg %p243
        %p403 = pneg %p240
        %s404 = sand.u32 %s230, 1
        %s405 = scalar_lea.sflag [#allocation4], %s404
        %s406 = sand.u32 %s230, 1
        %s407 = smul.addr %s406, 56
        %s408 = scalar_lea.vmem [#allocation11], %s407
        %s409 = smul.u32 7, %s28
        %s410 = smul.u32 7, %s28
        %v412 = vld [vmem:[%s358] sm:$0xf]
        %v413 = vld [vmem:[%s358 + $0x4] sm:$0xf]
        %v414 = vld [vmem:[%s358 + $0x8] sm:$0xf]
        %v415 = vld [vmem:[%s358 + $0xc] sm:$0xf]
        %v416 = vld [vmem:[%s358 + $0x10] sm:$0xf]
        %v417 = vld [vmem:[%s358 + $0x14] sm:$0xf]
        %v418 = vld [vmem:[%s358 + $0x18] sm:$0xf]
        %v419 = vld [vmem:[#allocation5] sm:$0xf]
        %v420 = vld [vmem:[#allocation5 + $0x4] sm:$0xf]
        %v421 = vld [vmem:[#allocation5 + $0x8] sm:$0xf]
        %v422 = vld [vmem:[#allocation5 + $0xc] sm:$0xf]
        %v423 = vld [vmem:[#allocation5 + $0x10] sm:$0xf]
        %v424 = vld [vmem:[#allocation5 + $0x14] sm:$0xf]
        %v425 = vld [vmem:[#allocation5 + $0x18] sm:$0xf]
        %v426 = vld [vmem:[#allocation5 + $0x1c] sm:$0xf]
        %v427 = vld [vmem:[#allocation5 + $0x20] sm:$0xf]
        %v428 = vld [vmem:[#allocation5 + $0x24] sm:$0xf]
        %v429 = vld [vmem:[#allocation5 + $0x28] sm:$0xf]
        %v430 = vld [vmem:[#allocation5 + $0x2c] sm:$0xf]
        %v431 = vld [vmem:[#allocation5 + $0x30] sm:$0xf]
        %v432 = vld [vmem:[#allocation5 + $0x34] sm:$0xf]
        %v433 = vld [vmem:[#allocation5 + $0x38] sm:$0xf]
        %v434 = vld [vmem:[#allocation5 + $0x3c] sm:$0xf]
        %v435 = vld [vmem:[%s2] sm:$0x1]
        %v437 = vlaneseq
        %v438 = vshrl.u32 %v437, 7
        %v439 = vsub.s32 0, %v438
        %v440 = vrot.slane %v435, %v439
        %v449 = vunpack.c.l.b16 %v412
        %v450 = vunpack.c.l.b16 %v413
        %v451 = vunpack.c.l.b16 %v414
        %v452 = vunpack.c.l.b16 %v415
        %v453 = vunpack.c.l.b16 %v416
        %v454 = vunpack.c.l.b16 %v417
        %v455 = vunpack.c.l.b16 %v418
        %v456 = vpack.c.b16 %v450, %v449
        %v457 = vpack.c.b16 %v452, %v451
        %v458 = vpack.c.b16 %v454, %v453
        %v459 = vpack.c.b16 %v455, %v455
        %v480 = vunpack.c.l.b16 %v419
        %v481 = vunpack.c.l.b16 %v420
        %v482 = vunpack.c.l.b16 %v421
        %v483 = vunpack.c.l.b16 %v422
        %v484 = vunpack.c.l.b16 %v423
        %v485 = vunpack.c.l.b16 %v424
        %v486 = vunpack.c.l.b16 %v425
        %v487 = vunpack.c.l.b16 %v426
        %v488 = vunpack.c.l.b16 %v427
        %v489 = vunpack.c.l.b16 %v428
        %v490 = vunpack.c.l.b16 %v429
        %v491 = vunpack.c.l.b16 %v430
        %v492 = vunpack.c.l.b16 %v431
        %v493 = vunpack.c.l.b16 %v432
        %v494 = vunpack.c.l.b16 %v433
        %v495 = vunpack.c.l.b16 %v434
        %v496 = vpack.c.b16 %v481, %v480
        %v497 = vpack.c.b16 %v483, %v482
        %v498 = vpack.c.b16 %v485, %v484
        %v499 = vpack.c.b16 %v487, %v486
        %v500 = vpack.c.b16 %v489, %v488
        %v501 = vpack.c.b16 %v491, %v490
        %v502 = vpack.c.b16 %v493, %v492
        %v503 = vpack.c.b16 %v495, %v494
        %512 = vmatprep.subr.bf16.mxu0 0
        %513 = vmatpush1.bf16.msra.mxu0 %v496
        %514 = vmatprep.subr.bf16.mxu0 0
        %515 = vmatpush1.bf16.msra.mxu0 %v497
        %516 = vmatprep.subr.bf16.mxu0 0
        %517 = vmatpush1.bf16.msra.mxu0 %v498
        %518 = vmatprep.subr.bf16.mxu0 0
        %519 = vmatpush1.bf16.msra.mxu0 %v499
        %520 = vmatprep.subr.bf16.mxu0 0
        %521 = vmatpush1.bf16.msra.mxu0 %v500
        %522 = vmatprep.subr.bf16.mxu0 0
        %523 = vmatpush1.bf16.msra.mxu0 %v501
        %524 = vmatprep.subr.bf16.mxu0 0
        %525 = vmatpush1.bf16.msra.mxu0 %v502
        %526 = vmatprep.subr.bf16.mxu0 0
        %527 = vmatpush1.bf16.msra.mxu0 %v503
        %528 = vmatprep.subr.bf16.mxu0 0
        %529 = vmatpush1.bf16.msra.mxu0 0
        %530 = vmatprep.subr.bf16.mxu0 0
        %531 = vmatpush1.bf16.msra.mxu0 0
        %532 = vmatprep.subr.bf16.mxu0 0
        %533 = vmatpush1.bf16.msra.mxu0 0
        %534 = vmatprep.subr.bf16.mxu0 0
        %535 = vmatpush1.bf16.msra.mxu0 0
        %536 = vmatprep.subr.bf16.mxu0 0
        %537 = vmatpush1.bf16.msra.mxu0 0
        %538 = vmatprep.subr.bf16.mxu0 0
        %539 = vmatpush1.bf16.msra.mxu0 0
        %540 = vmatprep.subr.bf16.mxu0 0
        %541 = vmatpush1.bf16.msra.mxu0 0
        %542 = vmatprep.subr.bf16.mxu0 0
        %543 = vmatpush1.bf16.msra.mxu0 0
        %544 = vmatprep.mubr.bf16.mxu0 0
        %545 = vmatmul.mubr.bf16.gmra.mrb[0].mxu0 %v456
        %v546 = vpop.f32.mrb[0].mxu0
        %v547 = vadd.f32 %v440, %v546
        %v548 = vpop.f32.mrb[0].mxu0
        %v549 = vpop.f32.mrb[0].mxu0
        %v550 = vadd.f32 %v440, %v549
        %v551 = vpop.f32.mrb[0].mxu0
        %552 = vmatprep.mubr.bf16.mxu0 0
        %553 = vmatmul.mubr.bf16.gmra.mrb[0].mxu0 %v457
        %v554 = vpop.f32.mrb[0].mxu0
        %v555 = vadd.f32 %v440, %v554
        %v556 = vpop.f32.mrb[0].mxu0
        %v557 = vpop.f32.mrb[0].mxu0
        %v558 = vadd.f32 %v440, %v557
        %v559 = vpop.f32.mrb[0].mxu0
        %560 = vmatprep.mubr.bf16.mxu0 0
        %561 = vmatmul.mubr.bf16.gmra.mrb[0].mxu0 %v458
        %v562 = vpop.f32.mrb[0].mxu0
        %v563 = vadd.f32 %v440, %v562
        %v564 = vpop.f32.mrb[0].mxu0
        %v565 = vpop.f32.mrb[0].mxu0
        %v566 = vadd.f32 %v440, %v565
        %v567 = vpop.f32.mrb[0].mxu0
        %568 = vmatprep.mubr.bf16.mxu0 0
        %569 = vmatmul.mubr.bf16.gmra.mrb[0].mxu0 %v459
        %v570 = vpop.f32.mrb[0].mxu0
        %v571 = vadd.f32 %v440, %v570
        %v572 = vpop.f32.mrb[0].mxu0
        %v573 = vpop.f32.mrb[0].mxu0
        %v574 = vpop.f32.mrb[0].mxu0
        %575 = vdwg.mxu0
        %v576 = vmax.f32 %v547, 0.0
        %v577 = vmax.f32 %v550, 0.0
        %v578 = vmax.f32 %v555, 0.0
        %v579 = vmax.f32 %v558, 0.0
        %v580 = vmax.f32 %v563, 0.0
        %v581 = vmax.f32 %v566, 0.0
        %v582 = vmax.f32 %v571, 0.0
        %v583 = vpack.c.bf16 %v577, %v576
        %v584 = vpack.c.bf16 %v579, %v578
        %v585 = vpack.c.bf16 %v581, %v580
        %v586 = vpack.c.bf16 %v582, %v582
        %v587 = vld [vmem:[#allocation7] sm:$0xf]
        %v588 = vld [vmem:[#allocation7 + $0x4] sm:$0xf]
        %v589 = vld [vmem:[#allocation7 + $0x8] sm:$0xf]
        %v590 = vld [vmem:[#allocation7 + $0xc] sm:$0xf]
        %v591 = vld [vmem:[#allocation7 + $0x10] sm:$0xf]
        %v592 = vld [vmem:[#allocation7 + $0x14] sm:$0xf]
        %v593 = vld [vmem:[#allocation7 + $0x18] sm:$0xf]
        %v594 = vld [vmem:[#allocation7 + $0x1c] sm:$0xf]
        %v595 = vld [vmem:[#allocation7 + $0x20] sm:$0xf]
        %v596 = vld [vmem:[#allocation7 + $0x24] sm:$0xf]
        %v597 = vld [vmem:[#allocation7 + $0x28] sm:$0xf]
        %v598 = vld [vmem:[#allocation7 + $0x2c] sm:$0xf]
        %v599 = vld [vmem:[#allocation7 + $0x30] sm:$0xf]
        %v600 = vld [vmem:[#allocation7 + $0x34] sm:$0xf]
        %v601 = vld [vmem:[#allocation7 + $0x38] sm:$0xf]
        %v602 = vld [vmem:[#allocation7 + $0x3c] sm:$0xf]
        %v603 = vld [vmem:[%s4] sm:$0x1]
        %v605 = vlaneseq
        %v606 = vshrl.u32 %v605, 7
        %v607 = vsub.s32 0, %v606
        %v608 = vrot.slane %v603, %v607
        %v626 = vunpack.c.l.b16 %v587
        %v627 = vunpack.c.l.b16 %v588
        %v628 = vunpack.c.l.b16 %v589
        %v629 = vunpack.c.l.b16 %v590
        %v630 = vunpack.c.l.b16 %v591
        %v631 = vunpack.c.l.b16 %v592
        %v632 = vunpack.c.l.b16 %v593
        %v633 = vunpack.c.l.b16 %v594
        %v634 = vunpack.c.l.b16 %v595
        %v635 = vunpack.c.l.b16 %v596
        %v636 = vunpack.c.l.b16 %v597
        %v637 = vunpack.c.l.b16 %v598
        %v638 = vunpack.c.l.b16 %v599
        %v639 = vunpack.c.l.b16 %v600
        %v640 = vunpack.c.l.b16 %v601
        %v641 = vunpack.c.l.b16 %v602
        %v642 = vpack.c.b16 %v627, %v626
        %v643 = vpack.c.b16 %v629, %v628
        %v644 = vpack.c.b16 %v631, %v630
        %v645 = vpack.c.b16 %v633, %v632
        %v646 = vpack.c.b16 %v635, %v634
        %v647 = vpack.c.b16 %v637, %v636
        %v648 = vpack.c.b16 %v639, %v638
        %v649 = vpack.c.b16 %v641, %v640
        %658 = vmatprep.subr.bf16.mxu0 0
        %659 = vmatpush1.bf16.msra.mxu0 %v642
        %660 = vmatprep.subr.bf16.mxu0 0
        %661 = vmatpush1.bf16.msra.mxu0 %v643
        %662 = vmatprep.subr.bf16.mxu0 0
        %663 = vmatpush1.bf16.msra.mxu0 %v644
        %664 = vmatprep.subr.bf16.mxu0 0
        %665 = vmatpush1.bf16.msra.mxu0 %v645
        %666 = vmatprep.subr.bf16.mxu0 0
        %667 = vmatpush1.bf16.msra.mxu0 %v646
        %668 = vmatprep.subr.bf16.mxu0 0
        %669 = vmatpush1.bf16.msra.mxu0 %v647
        %670 = vmatprep.subr.bf16.mxu0 0
        %671 = vmatpush1.bf16.msra.mxu0 %v648
        %672 = vmatprep.subr.bf16.mxu0 0
        %673 = vmatpush1.bf16.msra.mxu0 %v649
        %674 = vmatprep.subr.bf16.mxu0 0
        %675 = vmatpush1.bf16.msra.mxu0 0
        %676 = vmatprep.subr.bf16.mxu0 0
        %677 = vmatpush1.bf16.msra.mxu0 0
        %678 = vmatprep.subr.bf16.mxu0 0
        %679 = vmatpush1.bf16.msra.mxu0 0
        %680 = vmatprep.subr.bf16.mxu0 0
        %681 = vmatpush1.bf16.msra.mxu0 0
        %682 = vmatprep.subr.bf16.mxu0 0
        %683 = vmatpush1.bf16.msra.mxu0 0
        %684 = vmatprep.subr.bf16.mxu0 0
        %685 = vmatpush1.bf16.msra.mxu0 0
        %686 = vmatprep.subr.bf16.mxu0 0
        %687 = vmatpush1.bf16.msra.mxu0 0
        %688 = vmatprep.subr.bf16.mxu0 0
        %689 = vmatpush1.bf16.msra.mxu0 0
        %690 = vmatprep.mubr.bf16.mxu0 0
        %691 = vmatmul.mubr.bf16.gmra.mrb[0].mxu0 %v583
        %v692 = vpop.f32.mrb[0].mxu0
        %v693 = vadd.f32 %v608, %v692
        %v694 = vpop.f32.mrb[0].mxu0
        %v695 = vpop.f32.mrb[0].mxu0
        %v696 = vadd.f32 %v608, %v695
        %v697 = vpop.f32.mrb[0].mxu0
        %698 = vmatprep.mubr.bf16.mxu0 0
        %699 = vmatmul.mubr.bf16.gmra.mrb[0].mxu0 %v584
        %v700 = vpop.f32.mrb[0].mxu0
        %v701 = vadd.f32 %v608, %v700
        %v702 = vpop.f32.mrb[0].mxu0
        %v703 = vpop.f32.mrb[0].mxu0
        %v704 = vadd.f32 %v608, %v703
        %v705 = vpop.f32.mrb[0].mxu0
        %706 = vmatprep.mubr.bf16.mxu0 0
        %707 = vmatmul.mubr.bf16.gmra.mrb[0].mxu0 %v585
        %v708 = vpop.f32.mrb[0].mxu0
        %v709 = vadd.f32 %v608, %v708
        %v710 = vpop.f32.mrb[0].mxu0
        %v711 = vpop.f32.mrb[0].mxu0
        %v712 = vadd.f32 %v608, %v711
        %v713 = vpop.f32.mrb[0].mxu0
        %714 = vmatprep.mubr.bf16.mxu0 0
        %715 = vmatmul.mubr.bf16.gmra.mrb[0].mxu0 %v586
        %v716 = vpop.f32.mrb[0].mxu0
        %v717 = vadd.f32 %v608, %v716
        %v718 = vpop.f32.mrb[0].mxu0
        %v719 = vpop.f32.mrb[0].mxu0
        %v720 = vpop.f32.mrb[0].mxu0
        %721 = vdwg.mxu0
        %v722 = vadd.f32 %v693, %v576
        %v723 = vadd.f32 %v696, %v577
        %v724 = vadd.f32 %v701, %v578
        %v725 = vadd.f32 %v704, %v579
        %v726 = vadd.f32 %v709, %v580
        %v727 = vadd.f32 %v712, %v581
        %v728 = vadd.f32 %v717, %v582
        %v729 = vmax.f32 %v722, 0.0
        %v730 = vmax.f32 %v723, 0.0
        %v731 = vmax.f32 %v724, 0.0
        %v732 = vmax.f32 %v725, 0.0
        %v733 = vmax.f32 %v726, 0.0
        %v734 = vmax.f32 %v727, 0.0
        %v735 = vmax.f32 %v728, 0.0
        %v736 = vpack.c.bf16 %v730, %v729
        %v737 = vpack.c.bf16 %v732, %v731
        %v738 = vpack.c.bf16 %v734, %v733
        %v739 = vpack.c.bf16 %v735, %v735
        %v740 = vld [vmem:[#allocation8] sm:$0xf]
        %v741 = vld [vmem:[#allocation8 + $0x4] sm:$0xf]
        %v742 = vld [vmem:[#allocation8 + $0x8] sm:$0xf]
        %v743 = vld [vmem:[#allocation8 + $0xc] sm:$0xf]
        %v744 = vld [vmem:[#allocation8 + $0x10] sm:$0xf]
        %v745 = vld [vmem:[#allocation8 + $0x14] sm:$0xf]
        %v746 = vld [vmem:[#allocation8 + $0x18] sm:$0xf]
        %v747 = vld [vmem:[#allocation8 + $0x1c] sm:$0xf]
        %v748 = vld [vmem:[#allocation8 + $0x20] sm:$0xf]
        %v749 = vld [vmem:[#allocation8 + $0x24] sm:$0xf]
        %v750 = vld [vmem:[#allocation8 + $0x28] sm:$0xf]
        %v751 = vld [vmem:[#allocation8 + $0x2c] sm:$0xf]
        %v752 = vld [vmem:[#allocation8 + $0x30] sm:$0xf]
        %v753 = vld [vmem:[#allocation8 + $0x34] sm:$0xf]
        %v754 = vld [vmem:[#allocation8 + $0x38] sm:$0xf]
        %v755 = vld [vmem:[#allocation8 + $0x3c] sm:$0xf]
        %v756 = vld [vmem:[%s6] sm:$0x1]
        %v758 = vlaneseq
        %v759 = vshrl.u32 %v758, 7
        %v760 = vsub.s32 0, %v759
        %v761 = vrot.slane %v756, %v760
        %v779 = vunpack.c.l.b16 %v740
        %v780 = vunpack.c.l.b16 %v741
        %v781 = vunpack.c.l.b16 %v742
        %v782 = vunpack.c.l.b16 %v743
        %v783 = vunpack.c.l.b16 %v744
        %v784 = vunpack.c.l.b16 %v745
        %v785 = vunpack.c.l.b16 %v746
        %v786 = vunpack.c.l.b16 %v747
        %v787 = vunpack.c.l.b16 %v748
        %v788 = vunpack.c.l.b16 %v749
        %v789 = vunpack.c.l.b16 %v750
        %v790 = vunpack.c.l.b16 %v751
        %v791 = vunpack.c.l.b16 %v752
        %v792 = vunpack.c.l.b16 %v753
        %v793 = vunpack.c.l.b16 %v754
        %v794 = vunpack.c.l.b16 %v755
        %v795 = vpack.c.b16 %v780, %v779
        %v796 = vpack.c.b16 %v782, %v781
        %v797 = vpack.c.b16 %v784, %v783
        %v798 = vpack.c.b16 %v786, %v785
        %v799 = vpack.c.b16 %v788, %v787
        %v800 = vpack.c.b16 %v790, %v789
        %v801 = vpack.c.b16 %v792, %v791
        %v802 = vpack.c.b16 %v794, %v793
        %811 = vmatprep.subr.bf16.mxu0 0
        %812 = vmatpush1.bf16.msra.mxu0 %v795
        %813 = vmatprep.subr.bf16.mxu0 0
        %814 = vmatpush1.bf16.msra.mxu0 %v796
        %815 = vmatprep.subr.bf16.mxu0 0
        %816 = vmatpush1.bf16.msra.mxu0 %v797
        %817 = vmatprep.subr.bf16.mxu0 0
        %818 = vmatpush1.bf16.msra.mxu0 %v798
        %819 = vmatprep.subr.bf16.mxu0 0
        %820 = vmatpush1.bf16.msra.mxu0 %v799
        %821 = vmatprep.subr.bf16.mxu0 0
        %822 = vmatpush1.bf16.msra.mxu0 %v800
        %823 = vmatprep.subr.bf16.mxu0 0
        %824 = vmatpush1.bf16.msra.mxu0 %v801
        %825 = vmatprep.subr.bf16.mxu0 0
        %826 = vmatpush1.bf16.msra.mxu0 %v802
        %827 = vmatprep.subr.bf16.mxu0 0
        %828 = vmatpush1.bf16.msra.mxu0 0
        %829 = vmatprep.subr.bf16.mxu0 0
        %830 = vmatpush1.bf16.msra.mxu0 0
        %831 = vmatprep.subr.bf16.mxu0 0
        %832 = vmatpush1.bf16.msra.mxu0 0
        %833 = vmatprep.subr.bf16.mxu0 0
        %834 = vmatpush1.bf16.msra.mxu0 0
        %835 = vmatprep.subr.bf16.mxu0 0
        %836 = vmatpush1.bf16.msra.mxu0 0
        %837 = vmatprep.subr.bf16.mxu0 0
        %838 = vmatpush1.bf16.msra.mxu0 0
        %839 = vmatprep.subr.bf16.mxu0 0
        %840 = vmatpush1.bf16.msra.mxu0 0
        %841 = vmatprep.subr.bf16.mxu0 0
        %842 = vmatpush1.bf16.msra.mxu0 0
        %843 = vmatprep.mubr.bf16.mxu0 0
        %844 = vmatmul.mubr.bf16.gmra.mrb[0].mxu0 %v736
        %v845 = vpop.f32.mrb[0].mxu0
        %v846 = vadd.f32 %v761, %v845
        %v847 = vpop.f32.mrb[0].mxu0
        %v848 = vpop.f32.mrb[0].mxu0
        %v849 = vadd.f32 %v761, %v848
        %v850 = vpop.f32.mrb[0].mxu0
        %851 = vmatprep.mubr.bf16.mxu0 0
        %852 = vmatmul.mubr.bf16.gmra.mrb[0].mxu0 %v737
        %v853 = vpop.f32.mrb[0].mxu0
        %v854 = vadd.f32 %v761, %v853
        %v855 = vpop.f32.mrb[0].mxu0
        %v856 = vpop.f32.mrb[0].mxu0
        %v857 = vadd.f32 %v761, %v856
        %v858 = vpop.f32.mrb[0].mxu0
        %859 = vmatprep.mubr.bf16.mxu0 0
        %860 = vmatmul.mubr.bf16.gmra.mrb[0].mxu0 %v738
        %v861 = vpop.f32.mrb[0].mxu0
        %v862 = vadd.f32 %v761, %v861
        %v863 = vpop.f32.mrb[0].mxu0
        %v864 = vpop.f32.mrb[0].mxu0
        %v865 = vadd.f32 %v761, %v864
        %v866 = vpop.f32.mrb[0].mxu0
        %867 = vmatprep.mubr.bf16.mxu0 0
        %868 = vmatmul.mubr.bf16.gmra.mrb[0].mxu0 %v739
        %v869 = vpop.f32.mrb[0].mxu0
        %v870 = vadd.f32 %v761, %v869
        %v871 = vpop.f32.mrb[0].mxu0
        %v872 = vpop.f32.mrb[0].mxu0
        %v873 = vpop.f32.mrb[0].mxu0
        %874 = vdwg.mxu0
        %v875 = vmax.f32 %v846, 0.0
        %v876 = vmax.f32 %v849, 0.0
        %v877 = vmax.f32 %v854, 0.0
        %v878 = vmax.f32 %v857, 0.0
        %v879 = vmax.f32 %v862, 0.0
        %v880 = vmax.f32 %v865, 0.0
        %v881 = vmax.f32 %v870, 0.0
        %v882 = vpack.c.bf16 %v876, %v875
        %v883 = vpack.c.bf16 %v878, %v877
        %v884 = vpack.c.bf16 %v880, %v879
        %v885 = vpack.c.bf16 %v881, %v881
        %v886 = vld [vmem:[#allocation10] sm:$0xf]
        %v887 = vld [vmem:[#allocation10 + $0x4] sm:$0xf]
        %v888 = vld [vmem:[#allocation10 + $0x8] sm:$0xf]
        %v889 = vld [vmem:[#allocation10 + $0xc] sm:$0xf]
        %v890 = vld [vmem:[#allocation10 + $0x10] sm:$0xf]
        %v891 = vld [vmem:[#allocation10 + $0x14] sm:$0xf]
        %v892 = vld [vmem:[#allocation10 + $0x18] sm:$0xf]
        %v893 = vld [vmem:[#allocation10 + $0x1c] sm:$0xf]
        %v894 = vld [vmem:[#allocation10 + $0x20] sm:$0xf]
        %v895 = vld [vmem:[#allocation10 + $0x24] sm:$0xf]
        %v896 = vld [vmem:[#allocation10 + $0x28] sm:$0xf]
        %v897 = vld [vmem:[#allocation10 + $0x2c] sm:$0xf]
        %v898 = vld [vmem:[#allocation10 + $0x30] sm:$0xf]
        %v899 = vld [vmem:[#allocation10 + $0x34] sm:$0xf]
        %v900 = vld [vmem:[#allocation10 + $0x38] sm:$0xf]
        %v901 = vld [vmem:[#allocation10 + $0x3c] sm:$0xf]
        %v902 = vld [vmem:[%s8] sm:$0x1]
        %v904 = vlaneseq
        %v905 = vshrl.u32 %v904, 7
        %v906 = vsub.s32 0, %v905
        %v907 = vrot.slane %v902, %v906
        %v925 = vunpack.c.l.b16 %v886
        %v926 = vunpack.c.l.b16 %v887
        %v927 = vunpack.c.l.b16 %v888
        %v928 = vunpack.c.l.b16 %v889
        %v929 = vunpack.c.l.b16 %v890
        %v930 = vunpack.c.l.b16 %v891
        %v931 = vunpack.c.l.b16 %v892
        %v932 = vunpack.c.l.b16 %v893
        %v933 = vunpack.c.l.b16 %v894
        %v934 = vunpack.c.l.b16 %v895
        %v935 = vunpack.c.l.b16 %v896
        %v936 = vunpack.c.l.b16 %v897
        %v937 = vunpack.c.l.b16 %v898
        %v938 = vunpack.c.l.b16 %v899
        %v939 = vunpack.c.l.b16 %v900
        %v940 = vunpack.c.l.b16 %v901
        %v941 = vpack.c.b16 %v926, %v925
        %v942 = vpack.c.b16 %v928, %v927
        %v943 = vpack.c.b16 %v930, %v929
        %v944 = vpack.c.b16 %v932, %v931
        %v945 = vpack.c.b16 %v934, %v933
        %v946 = vpack.c.b16 %v936, %v935
        %v947 = vpack.c.b16 %v938, %v937
        %v948 = vpack.c.b16 %v940, %v939
        %957 = vmatprep.subr.bf16.mxu0 0
        %958 = vmatpush1.bf16.msra.mxu0 %v941
        %959 = vmatprep.subr.bf16.mxu0 0
        %960 = vmatpush1.bf16.msra.mxu0 %v942
        %961 = vmatprep.subr.bf16.mxu0 0
        %962 = vmatpush1.bf16.msra.mxu0 %v943
        %963 = vmatprep.subr.bf16.mxu0 0
        %964 = vmatpush1.bf16.msra.mxu0 %v944
        %965 = vmatprep.subr.bf16.mxu0 0
        %966 = vmatpush1.bf16.msra.mxu0 %v945
        %967 = vmatprep.subr.bf16.mxu0 0
        %968 = vmatpush1.bf16.msra.mxu0 %v946
        %969 = vmatprep.subr.bf16.mxu0 0
        %970 = vmatpush1.bf16.msra.mxu0 %v947
        %971 = vmatprep.subr.bf16.mxu0 0
        %972 = vmatpush1.bf16.msra.mxu0 %v948
        %973 = vmatprep.subr.bf16.mxu0 0
        %974 = vmatpush1.bf16.msra.mxu0 0
        %975 = vmatprep.subr.bf16.mxu0 0
        %976 = vmatpush1.bf16.msra.mxu0 0
        %977 = vmatprep.subr.bf16.mxu0 0
        %978 = vmatpush1.bf16.msra.mxu0 0
        %979 = vmatprep.subr.bf16.mxu0 0
        %980 = vmatpush1.bf16.msra.mxu0 0
        %981 = vmatprep.subr.bf16.mxu0 0
        %982 = vmatpush1.bf16.msra.mxu0 0
        %983 = vmatprep.subr.bf16.mxu0 0
        %984 = vmatpush1.bf16.msra.mxu0 0
        %985 = vmatprep.subr.bf16.mxu0 0
        %986 = vmatpush1.bf16.msra.mxu0 0
        %987 = vmatprep.subr.bf16.mxu0 0
        %988 = vmatpush1.bf16.msra.mxu0 0
        %989 = vmatprep.mubr.bf16.mxu0 0
        %990 = vmatmul.mubr.bf16.gmra.mrb[0].mxu0 %v882
        %v991 = vpop.f32.mrb[0].mxu0
        %v992 = vadd.f32 %v907, %v991
        %v993 = vpop.f32.mrb[0].mxu0
        %v994 = vpop.f32.mrb[0].mxu0
        %v995 = vadd.f32 %v907, %v994
        %v996 = vpop.f32.mrb[0].mxu0
        %997 = vmatprep.mubr.bf16.mxu0 0
        %998 = vmatmul.mubr.bf16.gmra.mrb[0].mxu0 %v883
        %v999 = vpop.f32.mrb[0].mxu0
        %v1000 = vadd.f32 %v907, %v999
        %v1001 = vpop.f32.mrb[0].mxu0
        %v1002 = vpop.f32.mrb[0].mxu0
        %v1003 = vadd.f32 %v907, %v1002
        %v1004 = vpop.f32.mrb[0].mxu0
        %1005 = vmatprep.mubr.bf16.mxu0 0
        %1006 = vmatmul.mubr.bf16.gmra.mrb[0].mxu0 %v884
        %v1007 = vpop.f32.mrb[0].mxu0
        %v1008 = vadd.f32 %v907, %v1007
        %v1009 = vpop.f32.mrb[0].mxu0
        %v1010 = vpop.f32.mrb[0].mxu0
        %v1011 = vadd.f32 %v907, %v1010
        %v1012 = vpop.f32.mrb[0].mxu0
        %1013 = vmatprep.mubr.bf16.mxu0 0
        %1014 = vmatmul.mubr.bf16.gmra.mrb[0].mxu0 %v885
        %v1015 = vpop.f32.mrb[0].mxu0
        %v1016 = vadd.f32 %v907, %v1015
        %v1017 = vpop.f32.mrb[0].mxu0
        %v1018 = vpop.f32.mrb[0].mxu0
        %v1019 = vpop.f32.mrb[0].mxu0
        %1020 = vdwg.mxu0
        %1021 = vst [vmem:[%s408] sm:$0xff] %v992
        %1022 = vst [vmem:[%s408 + $0x8] sm:$0xff] %v995
        %1023 = vst [vmem:[%s408 + $0x10] sm:$0xff] %v1000
        %1024 = vst [vmem:[%s408 + $0x18] sm:$0xff] %v1003
        %1025 = vst [vmem:[%s408 + $0x20] sm:$0xff] %v1008
        %1026 = vst [vmem:[%s408 + $0x28] sm:$0xff] %v1011
        %1027 = vst [vmem:[%s408 + $0x30] sm:$0xff] %v1016
        %s1028 = sand.u32 %s230, 1
        %s1029 = scalar_lea.sflag [#allocation4], %s1028
        %s1030 = sand.u32 %s230, 1
        %s1031 = smul.addr %s1030, 56
        %s1032 = scalar_lea.vmem [#allocation11], %s1031
        // Predicated region
        $region77: #{tpu_custom_call.1} parent=55 // pred_check
          %p1033 = pneg %p240
        $region78: #{tpu_custom_call.1} parent=55 // pred_check_branch
          %1035 = sbr.rel (%p1033) target = $region80
        $region79: #{tpu_custom_call.1} parent=55 // pred_region
          %s1036 = smul.u32 7, %s28
          %s1038 = ssub.s32 896, 896
          %1039 = vsyncadd %s1029, %s1038
          %s1040 = smul.addr %s1036, 128
          %s1041 = scalar_lea.hbm %s9, %s1040
          %s1042 = sshll.u32 %s1032, 4
          %s1043 = int_to_ptr.vmem [resolvable:$true] %s1042
          %1048 = dma.vmem_to_hbm [thread:$0]  %s1043, 896, %s1041, %s1029, 128, 128, 8
        $region80: #{tpu_custom_call.1} parent=55 // pred_fallthru
          _
      $region56: #{tpu_custom_call.1} parent=5 // pred_fallthru
        _
      %p1049 = scmp.le.s32.totalorder 2, %s23
      // Predicated region
      $region81: #{tpu_custom_call.1} parent=5 // pred_check
        %p1050 = pneg %p1049
      $region82: #{tpu_custom_call.1} parent=5 // pred_check_branch
        %1052 = sbr.rel (%p1050) target = $region84
      $region83: #{tpu_custom_call.1} parent=5 // pred_region
        %s1053 = ssub.s32 %s23, 2
        // Predicated region
        $region85: #{tpu_custom_call.1} parent=83 // pred_check
          %p1054 = pneg %p246
        $region86: #{tpu_custom_call.1} parent=83 // pred_check_branch
          %1056 = sbr.rel (%p1054) target = $region88
        $region87: #{tpu_custom_call.1} parent=83 // pred_region
          %s1057 = sand.u32 %s231, 1
          %s1058 = scalar_lea.sflag [#allocation4], %s1057
          %s1059 = sand.u32 %s231, 1
          %s1060 = smul.addr %s1059, 56
          %s1061 = scalar_lea.vmem [#allocation11], %s1060
          %1062 = dma.done %s1058, 896
        $region88: #{tpu_custom_call.1} parent=83 // pred_fallthru
          _
      $region84: #{tpu_custom_call.1} parent=5 // pred_fallthru
        _
    $region6: #{tpu_custom_call.1} parent=1 // loop_footer
      %s27 = sadd.s32 1, %s23
    $region7: #{tpu_custom_call.1} parent=1 // loop_footer_branch
      %22 = sbr.rel target = $region3
    $region8: #{tpu_custom_call.1} parent=1 // loop_exit
      _
    %1063 = vsyncpa [#allocation3], 1
    %s1064 = scalar_lea.sflag [#allocation3], 1
    %1065 = vsyncpa %s1064, 1
    %1066 = vsyncpa [#allocation6], 1
    %1067 = vsyncpa [#allocation9], 1
    %1068 = vsyncpa [#allocation4], 1
    %s1069 = scalar_lea.sflag [#allocation4], 1
    %1070 = vsyncpa %s1069, 1

// kernel: tpu_custom_call.1
$region0: #{tpu_custom_call.1}
  #allocation0 [shape = 'u32[]', space=smem, size = 0x4, offset = 0x4, fixed_abs, tag = 'smem constant byte address 0x4 - core index']
  #allocation1 [shape = 'u32[144,128]{1,0:T(1,128)}', space=vmem, size = 0x12000, scoped, tag = 'internal scratch']
  %s0 = inlined_call_operand.hbm [shape: bf16[112,128], index: 0, kind: input, shape index: {}]
  %s1 = inlined_call_operand.hbm [shape: bf16[128,128], index: 1, kind: input, shape index: {}]
  %s2 = inlined_call_operand.vmem [shape: f32[1,128], index: 2, kind: input, shape index: {}]
  %s3 = inlined_call_operand.hbm [shape: bf16[128,128], index: 3, kind: input, shape index: {}]
  %s4 = inlined_call_operand.vmem [shape: f32[1,128], index: 4, kind: input, shape index: {}]
  %s5 = inlined_call_operand.hbm [shape: bf16[128,128], index: 5, kind: input, shape index: {}]
  %s6 = inlined_call_operand.vmem [shape: f32[1,128], index: 6, kind: input, shape index: {}]
  %s7 = inlined_call_operand.hbm [shape: bf16[128,128], index: 7, kind: input, shape index: {}]
  %s8 = inlined_call_operand.vmem [shape: f32[1,128], index: 8, kind: input, shape index: {}]
  %s9 = inlined_call_operand.hbm [shape: f32[112,128], index: 9, kind: output, shape index: {}]
  %s10 = sld [smem:[#allocation0]]
  $region89: #{tpu_custom_call.1} parent=0
    _
  %s12 = ssub.s32 1, %s10
  %s13 = scalar_select 0, %s12, %s10
  $region1: #{tpu_custom_call.1} parent=0
    #allocation2 [shape = 'u8[28672]{0}', space=vmem, size = 0x7000, scoped, tag = 'input window, operand 0']
    #allocation3 [shape = 's32[2]{0}', space=sflag, size = 0x8, scoped, tag = 'scoped memory for tpu_custom_call.1']
    #allocation4 [shape = 's32[2]{0}', space=sflag, size = 0x8, scoped, tag = 'scoped memory for tpu_custom_call.1']
    #allocation5 [shape = 'u8[32768]{0}', space=vmem, size = 0x8000, scoped, tag = 'input window, operand 1, single buffered']
    #allocation6 [shape = 's32[1]{0}', space=sflag, size = 0x4, scoped, tag = 'scoped memory for tpu_custom_call.1']
    #allocation7 [shape = 'u8[32768]{0}', space=vmem, size = 0x8000, scoped, tag = 'input window, operand 3, single buffered']
    #allocation8 [shape = 'u8[32768]{0}', space=vmem, size = 0x8000, scoped, tag = 'input window, operand 5, single buffered']
    #allocation9 [shape = 's32[1]{0}', space=sflag, size = 0x4, scoped, tag = 'scoped memory for tpu_custom_call.1']
    #allocation10 [shape = 'u8[32768]{0}', space=vmem, size = 0x8000, scoped, tag = 'input window, operand 7, single buffered']
    #allocation11 [shape = 'u8[57344]{0}', space=vmem, size = 0xe000, scoped, tag = 'output window, operand 0']
    %14 = vsyncpa [#allocation3], 0
    %s15 = scalar_lea.sflag [#allocation3], 1
    %16 = vsyncpa %s15, 0
    %17 = vsyncpa [#allocation6], 0
    %18 = vsyncpa [#allocation9], 0
    %19 = vsyncpa [#allocation4], 0
    %s20 = scalar_lea.sflag [#allocation4], 1
    %21 = vsyncpa %s20, 0
    loop: start=0, step=1, limit=4
    $region2: #{tpu_custom_call.1} parent=1 // loop_pre_header
      _
    $region3: #{tpu_custom_call.1} parent=1 // loop_header
      %s23 = sphi 0, %s27
      %p24 = scmp.ge.s32.totalorder %s23, 4
      %s33 = sphi 0, %s35
      %s36 = sphi 0, %s33
      %s37 = sphi 0, %s36
      %s53 = sphi 0, %s37
      %s57 = sphi 0, %s57
      %s59 = sphi 0, %s57
      %s60 = sphi 0, %s59
      %s74 = sphi 0, %s60
      %s78 = sphi 0, %s78
      %s80 = sphi 0, %s78
      %s81 = sphi 0, %s80
      %s95 = sphi 0, %s81
      %s99 = sphi 0, %s99
      %s101 = sphi 0, %s99
      %s102 = sphi 0, %s101
      %s116 = sphi 0, %s102
      %s120 = sphi 0, %s120
      %s122 = sphi 0, %s120
      %s123 = sphi 0, %s122
      %s137 = sphi 0, %s123
      %s141 = sphi 0, %s141
      %s143 = sphi 0, %s141
      %s144 = sphi 0, %s143
      %s158 = sphi 0, %s144
      %s162 = sphi 0, %s162
      %s164 = sphi 0, %s162
      %s165 = sphi 0, %s164
      %s179 = sphi 0, %s165
      %s183 = sphi 0, %s183
      %s185 = sphi 0, %s183
      %s186 = sphi 0, %s185
      %s200 = sphi 0, %s186
      %s204 = sphi 0, %s204
      %s206 = sphi 0, %s204
      %s207 = sphi 0, %s206
      %s221 = sphi 0, %s207
      %s227 = sphi 0, %s229
      %s230 = sphi 0, %s227
      %s231 = sphi 0, %s230
      %s247 = sphi 0, %s231
    $region4: #{tpu_custom_call.1} parent=1 // loop_header_branch
      %26 = sbr.rel (%p24) target = $region8
    $region5: #{tpu_custom_call.1} parent=1 // loop_body
      %s28 = ssub.s32 %s23, 1
      %s29 = ssub.s32 %s23, 2
      %s30 = sadd.s32 %s23, 1
      %s31 = ssub.s32 %s23, %s30
      %p32 = scmp.eq.s32.totalorder %s31, 0
      %s34 = sadd.s32 %s33, 1
      %s35 = scalar_select %p32, %s33, %s34
      %p38 = pneg %p32
      %p39 = scmp.eq.s32.totalorder %s23, 1
      %p40 = por %p38, %p39
      %p41 = scmp.ne.s32.totalorder %s33, %s36
      %p42 = scmp.eq.s32.totalorder %s23, 0
      %p43 = por %p41, %p42
      %p44 = scmp.ne.s32.totalorder %s33, %s36
      %p45 = scmp.eq.s32.totalorder %s28, 1
      %p46 = por %p44, %p45
      %p47 = scmp.ne.s32.totalorder %s36, %s37
      %p48 = scmp.eq.s32.totalorder %s28, 0
      %p49 = por %p47, %p48
      %p50 = scmp.ne.s32.totalorder %s36, %s37
      %p51 = scmp.eq.s32.totalorder %s29, 1
      %p52 = por %p50, %p51
      %p54 = scmp.ne.s32.totalorder %s37, %s53
      %p55 = scmp.eq.s32.totalorder %s29, 0
      %p56 = por %p54, %p55
      %s58 = sadd.s32 %s57, 1
      %p61 = scmp.eq.s32.totalorder %s23, 1
      %p62 = scmp.ne.s32.totalorder %s57, %s59
      %p63 = scmp.eq.s32.totalorder %s23, 0
      %p64 = por %p62, %p63
      %p65 = scmp.ne.s32.totalorder %s57, %s59
      %p66 = scmp.eq.s32.totalorder %s28, 1
      %p67 = por %p65, %p66
      %p68 = scmp.ne.s32.totalorder %s59, %s60
      %p69 = scmp.eq.s32.totalorder %s28, 0
      %p70 = por %p68, %p69
      %p71 = scmp.ne.s32.totalorder %s59, %s60
      %p72 = scmp.eq.s32.totalorder %s29, 1
      %p73 = por %p71, %p72
      %p75 = scmp.ne.s32.totalorder %s60, %s74
      %p76 = scmp.eq.s32.totalorder %s29, 0
      %p77 = por %p75, %p76
      %s79 = sadd.s32 %s78, 1
      %p82 = scmp.eq.s32.totalorder %s23, 1
      %p83 = scmp.ne.s32.totalorder %s78, %s80
      %p84 = scmp.eq.s32.totalorder %s23, 0
      %p85 = por %p83, %p84
      %p86 = scmp.ne.s32.totalorder %s78, %s80
      %p87 = scmp.eq.s32.totalorder %s28, 1
      %p88 = por %p86, %p87
      %p89 = scmp.ne.s32.totalorder %s80, %s81
      %p90 = scmp.eq.s32.totalorder %s28, 0
      %p91 = por %p89, %p90
      %p92 = scmp.ne.s32.totalorder %s80, %s81
      %p93 = scmp.eq.s32.totalorder %s29, 1
      %p94 = por %p92, %p93
      %p96 = scmp.ne.s32.totalorder %s81, %s95
      %p97 = scmp.eq.s32.totalorder %s29, 0
      %p98 = por %p96, %p97
      %s100 = sadd.s32 %s99, 1
      %p103 = scmp.eq.s32.totalorder %s23, 1
      %p104 = scmp.ne.s32.totalorder %s99, %s101
      %p105 = scmp.eq.s32.totalorder %s23, 0
      %p106 = por %p104, %p105
      %p107 = scmp.ne.s32.totalorder %s99, %s101
      %p108 = scmp.eq.s32.totalorder %s28, 1
      %p109 = por %p107, %p108
      %p110 = scmp.ne.s32.totalorder %s101, %s102
      %p111 = scmp.eq.s32.totalorder %s28, 0
      %p112 = por %p110, %p111
      %p113 = scmp.ne.s32.totalorder %s101, %s102
      %p114 = scmp.eq.s32.totalorder %s29, 1
      %p115 = por %p113, %p114
      %p117 = scmp.ne.s32.totalorder %s102, %s116
      %p118 = scmp.eq.s32.totalorder %s29, 0
      %p119 = por %p117, %p118
      %s121 = sadd.s32 %s120, 1
      %p124 = scmp.eq.s32.totalorder %s23, 1
      %p125 = scmp.ne.s32.totalorder %s120, %s122
      %p126 = scmp.eq.s32.totalorder %s23, 0
      %p127 = por %p125, %p126
      %p128 = scmp.ne.s32.totalorder %s120, %s122
      %p129 = scmp.eq.s32.totalorder %s28, 1
      %p130 = por %p128, %p129
      %p131 = scmp.ne.s32.totalorder %s122, %s123
      %p132 = scmp.eq.s32.totalorder %s28, 0
      %p133 = por %p131, %p132
      %p134 = scmp.ne.s32.totalorder %s122, %s123
      %p135 = scmp.eq.s32.totalorder %s29, 1
      %p136 = por %p134, %p135
      %p138 = scmp.ne.s32.totalorder %s123, %s137
      %p139 = scmp.eq.s32.totalorder %s29, 0
      %p140 = por %p138, %p139
      %s142 = sadd.s32 %s141, 1
      %p145 = scmp.eq.s32.totalorder %s23, 1
      %p146 = scmp.ne.s32.totalorder %s141, %s143
      %p147 = scmp.eq.s32.totalorder %s23, 0
      %p148 = por %p146, %p147
      %p149 = scmp.ne.s32.totalorder %s141, %s143
      %p150 = scmp.eq.s32.totalorder %s28, 1
      %p151 = por %p149, %p150
      %p152 = scmp.ne.s32.totalorder %s143, %s144
      %p153 = scmp.eq.s32.totalorder %s28, 0
      %p154 = por %p152, %p153
      %p155 = scmp.ne.s32.totalorder %s143, %s144
      %p156 = scmp.eq.s32.totalorder %s29, 1
      %p157 = por %p155, %p156
      %p159 = scmp.ne.s32.totalorder %s144, %s158
      %p160 = scmp.eq.s32.totalorder %s29, 0
      %p161 = por %p159, %p160
      %s163 = sadd.s32 %s162, 1
      %p166 = scmp.eq.s32.totalorder %s23, 1
      %p167 = scmp.ne.s32.totalorder %s162, %s164
      %p168 = scmp.eq.s32.totalorder %s23, 0
      %p169 = por %p167, %p168
      %p170 = scmp.ne.s32.totalorder %s162, %s164
      %p171 = scmp.eq.s32.totalorder %s28, 1
      %p172 = por %p170, %p171
      %p173 = scmp.ne.s32.totalorder %s164, %s165
      %p174 = scmp.eq.s32.totalorder %s28, 0
      %p175 = por %p173, %p174
      %p176 = scmp.ne.s32.totalorder %s164, %s165
      %p177 = scmp.eq.s32.totalorder %s29, 1
      %p178 = por %p176, %p177
      %p180 = scmp.ne.s32.totalorder %s165, %s179
      %p181 = scmp.eq.s32.totalorder %s29, 0
      %p182 = por %p180, %p181
      %s184 = sadd.s32 %s183, 1
      %p187 = scmp.eq.s32.totalorder %s23, 1
      %p188 = scmp.ne.s32.totalorder %s183, %s185
      %p189 = scmp.eq.s32.totalorder %s23, 0
      %p190 = por %p188, %p189
      %p191 = scmp.ne.s32.totalorder %s183, %s185
      %p192 = scmp.eq.s32.totalorder %s28, 1
      %p193 = por %p191, %p192
      %p194 = scmp.ne.s32.totalorder %s185, %s186
      %p195 = scmp.eq.s32.totalorder %s28, 0
      %p196 = por %p194, %p195
      %p197 = scmp.ne.s32.totalorder %s185, %s186
      %p198 = scmp.eq.s32.totalorder %s29, 1
      %p199 = por %p197, %p198
      %p201 = scmp.ne.s32.totalorder %s186, %s200
      %p202 = scmp.eq.s32.totalorder %s29, 0
      %p203 = por %p201, %p202
      %s205 = sadd.s32 %s204, 1
      %p208 = scmp.eq.s32.totalorder %s23, 1
      %p209 = scmp.ne.s32.totalorder %s204, %s206
      %p210 = scmp.eq.s32.totalorder %s23, 0
      %p211 = por %p209, %p210
      %p212 = scmp.ne.s32.totalorder %s204, %s206
      %p213 = scmp.eq.s32.totalorder %s28, 1
      %p214 = por %p212, %p213
      %p215 = scmp.ne.s32.totalorder %s206, %s207
      %p216 = scmp.eq.s32.totalorder %s28, 0
      %p217 = por %p215, %p216
      %p218 = scmp.ne.s32.totalorder %s206, %s207
      %p219 = scmp.eq.s32.totalorder %s29, 1
      %p220 = por %p218, %p219
      %p222 = scmp.ne.s32.totalorder %s207, %s221
      %p223 = scmp.eq.s32.totalorder %s29, 0
      %p224 = por %p222, %p223
      %s225 = ssub.s32 %s23, %s30
      %p226 = scmp.eq.s32.totalorder %s225, 0
      %s228 = sadd.s32 %s227, 1
      %s229 = scalar_select %p226, %s227, %s228
      %p232 = pneg %p226
      %p233 = scmp.eq.s32.totalorder %s23, 1
      %p234 = por %p232, %p233
      %p235 = scmp.ne.s32.totalorder %s227, %s230
      %p236 = scmp.eq.s32.totalorder %s23, 0
      %p237 = por %p235, %p236
      %p238 = scmp.ne.s32.totalorder %s227, %s230
      %p239 = scmp.eq.s32.totalorder %s28, 1
      %p240 = por %p238, %p239
      %p241 = scmp.ne.s32.totalorder %s230, %s231
      %p242 = scmp.eq.s32.totalorder %s28, 0
      %p243 = por %p241, %p242
      %p244 = scmp.ne.s32.totalorder %s230, %s231
      %p245 = scmp.eq.s32.totalorder %s29, 1
      %p246 = por %p244, %p245
      %p248 = scmp.ne.s32.totalorder %s231, %s247
      %p249 = scmp.eq.s32.totalorder %s29, 0
      %p250 = por %p248, %p249
      %p251 = scmp.le.s32.totalorder 1, %s23
      %p252 = scmp.lt.s32.totalorder %s23, 3
      %p253 = pnand %p251, %p252
      %p254 = pneg %p253
      // Predicated region
      $region9: #{tpu_custom_call.1} parent=5 // pred_check
        _
      $region10: #{tpu_custom_call.1} parent=5 // pred_check_branch
        %256 = sbr.rel (%p253) target = $region12
      $region11: #{tpu_custom_call.1} parent=5 // pred_region
        %s257 = ssub.s32 %s23, 1
        // Predicated region
        $region13: #{tpu_custom_call.1} parent=11 // pred_check
          %p258 = pneg %p70
        $region14: #{tpu_custom_call.1} parent=11 // pred_check_branch
          %260 = sbr.rel (%p258) target = $region16
        $region15: #{tpu_custom_call.1} parent=11 // pred_region
          %s262 = ssub.s32 1024, 1024
          %263 = vsyncadd [#allocation6], %s262
          %s264 = sshll.u32 [#allocation5], 4
          %s265 = int_to_ptr.vmem [resolvable:$true] %s264
          %270 = dma.hbm_to_vmem [thread:$0]  %s1, 1024, %s265, [#allocation6], 64, 64, 4
        $region16: #{tpu_custom_call.1} parent=11 // pred_fallthru
          _
        // Predicated region
        $region17: #{tpu_custom_call.1} parent=11 // pred_check
          %p271 = pneg %p91
        $region18: #{tpu_custom_call.1} parent=11 // pred_check_branch
          %273 = sbr.rel (%p271) target = $region20
        $region19: #{tpu_custom_call.1} parent=11 // pred_region
          _
        $region20: #{tpu_custom_call.1} parent=11 // pred_fallthru
          _
        // Predicated region
        $region21: #{tpu_custom_call.1} parent=11 // pred_check
          %p274 = pneg %p112
        $region22: #{tpu_custom_call.1} parent=11 // pred_check_branch
          %276 = sbr.rel (%p274) target = $region24
        $region23: #{tpu_custom_call.1} parent=11 // pred_region
          %s278 = ssub.s32 1024, 1024
          %279 = vsyncadd [#allocation6], %s278
          %s280 = sshll.u32 [#allocation7], 4
          %s281 = int_to_ptr.vmem [resolvable:$true] %s280
          %286 = dma.hbm_to_vmem [thread:$0]  %s3, 1024, %s281, [#allocation6], 64, 64, 4
        $region24: #{tpu_custom_call.1} parent=11 // pred_fallthru
          _
        // Predicated region
        $region25: #{tpu_custom_call.1} parent=11 // pred_check
          %p287 = pneg %p133
        $region26: #{tpu_custom_call.1} parent=11 // pred_check_branch
          %289 = sbr.rel (%p287) target = $region28
        $region27: #{tpu_custom_call.1} parent=11 // pred_region
          _
        $region28: #{tpu_custom_call.1} parent=11 // pred_fallthru
          _
        // Predicated region
        $region29: #{tpu_custom_call.1} parent=11 // pred_check
          %p290 = pneg %p154
        $region30: #{tpu_custom_call.1} parent=11 // pred_check_branch
          %292 = sbr.rel (%p290) target = $region32
        $region31: #{tpu_custom_call.1} parent=11 // pred_region
          %s294 = ssub.s32 1024, 1024
          %295 = vsyncadd [#allocation9], %s294
          %s296 = sshll.u32 [#allocation8], 4
          %s297 = int_to_ptr.vmem [resolvable:$true] %s296
          %302 = dma.hbm_to_vmem [thread:$0]  %s5, 1024, %s297, [#allocation9], 64, 64, 4
        $region32: #{tpu_custom_call.1} parent=11 // pred_fallthru
          _
        // Predicated region
        $region33: #{tpu_custom_call.1} parent=11 // pred_check
          %p303 = pneg %p175
        $region34: #{tpu_custom_call.1} parent=11 // pred_check_branch
          %305 = sbr.rel (%p303) target = $region36
        $region35: #{tpu_custom_call.1} parent=11 // pred_region
          _
        $region36: #{tpu_custom_call.1} parent=11 // pred_fallthru
          _
        // Predicated region
        $region37: #{tpu_custom_call.1} parent=11 // pred_check
          %p306 = pneg %p196
        $region38: #{tpu_custom_call.1} parent=11 // pred_check_branch
          %308 = sbr.rel (%p306) target = $region40
        $region39: #{tpu_custom_call.1} parent=11 // pred_region
          %s310 = ssub.s32 1024, 1024
          %311 = vsyncadd [#allocation9], %s310
          %s312 = sshll.u32 [#allocation10], 4
          %s313 = int_to_ptr.vmem [resolvable:$true] %s312
          %318 = dma.hbm_to_vmem [thread:$0]  %s7, 1024, %s313, [#allocation9], 64, 64, 4
        $region40: #{tpu_custom_call.1} parent=11 // pred_fallthru
          _
        // Predicated region
        $region41: #{tpu_custom_call.1} parent=11 // pred_check
          %p319 = pneg %p217
        $region42: #{tpu_custom_call.1} parent=11 // pred_check_branch
          %321 = sbr.rel (%p319) target = $region44
        $region43: #{tpu_custom_call.1} parent=11 // pred_region
          _
        $region44: #{tpu_custom_call.1} parent=11 // pred_fallthru
          _
      $region12: #{tpu_custom_call.1} parent=5 // pred_fallthru
        _
      %p322 = scmp.lt.s32.totalorder %s23, 2
      // Predicated region
      $region45: #{tpu_custom_call.1} parent=5 // pred_check
        %p323 = pneg %p322
      $region46: #{tpu_custom_call.1} parent=5 // pred_check_branch
        %325 = sbr.rel (%p323) target = $region48
      $region47: #{tpu_custom_call.1} parent=5 // pred_region
        // Predicated region
        $region49: #{tpu_custom_call.1} parent=47 // pred_check
          %p326 = pneg %p43
        $region50: #{tpu_custom_call.1} parent=47 // pred_check_branch
          %328 = sbr.rel (%p326) target = $region52
        $region51: #{tpu_custom_call.1} parent=47 // pred_region
          %s329 = sand.u32 %s33, 1
          %s330 = scalar_lea.sflag [#allocation3], %s329
          %s331 = sand.u32 %s33, 1
          %s332 = smul.addr %s331, 28
          %s333 = scalar_lea.vmem [#allocation2], %s332
          %s334 = smul.u32 7, %s23
          %s336 = ssub.s32 448, 448
          %337 = vsyncadd %s330, %s336
          %s338 = smul.addr %s334, 64
          %s339 = scalar_lea.hbm %s0, %s338
          %s340 = sshll.u32 %s333, 4
          %s341 = int_to_ptr.vmem [resolvable:$true] %s340
          %346 = dma.hbm_to_vmem [thread:$0]  %s339, 448, %s341, %s330, 64, 64, 4
        $region52: #{tpu_custom_call.1} parent=47 // pred_fallthru
          _
      $region48: #{tpu_custom_call.1} parent=5 // pred_fallthru
        _
      %p347 = scmp.le.s32.totalorder 1, %s23
      %p348 = scmp.lt.s32.totalorder %s23, 3
      %p349 = pnand %p347, %p348
      %p350 = pneg %p349
      // Predicated region
      $region53: #{tpu_custom_call.1} parent=5 // pred_check
        _
      $region54: #{tpu_custom_call.1} parent=5 // pred_check_branch
        %352 = sbr.rel (%p349) target = $region56
      $region55: #{tpu_custom_call.1} parent=5 // pred_region
        %s353 = ssub.s32 %s23, 1
        %s354 = sand.u32 %s36, 1
        %s355 = scalar_lea.sflag [#allocation3], %s354
        %s356 = sand.u32 %s36, 1
        %s357 = smul.addr %s356, 28
        %s358 = scalar_lea.vmem [#allocation2], %s357
        // Predicated region
        $region57: #{tpu_custom_call.1} parent=55 // pred_check
          %p359 = pneg %p49
        $region58: #{tpu_custom_call.1} parent=55 // pred_check_branch
          %361 = sbr.rel (%p359) target = $region60
        $region59: #{tpu_custom_call.1} parent=55 // pred_region
          %362 = dma.done %s355, 448
        $region60: #{tpu_custom_call.1} parent=55 // pred_fallthru
          _
        // Predicated region
        $region61: #{tpu_custom_call.1} parent=55 // pred_check
          %p363 = pneg %p70
        $region62: #{tpu_custom_call.1} parent=55 // pred_check_branch
          %365 = sbr.rel (%p363) target = $region64
        $region63: #{tpu_custom_call.1} parent=55 // pred_region
          %366 = dma.done [#allocation6], 1024
        $region64: #{tpu_custom_call.1} parent=55 // pred_fallthru
          _
        // Predicated region
        $region65: #{tpu_custom_call.1} parent=55 // pred_check
          %p367 = pneg %p112
        $region66: #{tpu_custom_call.1} parent=55 // pred_check_branch
          %369 = sbr.rel (%p367) target = $region68
        $region67: #{tpu_custom_call.1} parent=55 // pred_region
          %370 = dma.done [#allocation6], 1024
        $region68: #{tpu_custom_call.1} parent=55 // pred_fallthru
          _
        // Predicated region
        $region69: #{tpu_custom_call.1} parent=55 // pred_check
          %p371 = pneg %p154
        $region70: #{tpu_custom_call.1} parent=55 // pred_check_branch
          %373 = sbr.rel (%p371) target = $region72
        $region71: #{tpu_custom_call.1} parent=55 // pred_region
          %374 = dma.done [#allocation9], 1024
        $region72: #{tpu_custom_call.1} parent=55 // pred_fallthru
          _
        // Predicated region
        $region73: #{tpu_custom_call.1} parent=55 // pred_check
          %p375 = pneg %p196
        $region74: #{tpu_custom_call.1} parent=55 // pred_check_branch
          %377 = sbr.rel (%p375) target = $region76
        $region75: #{tpu_custom_call.1} parent=55 // pred_region
          %378 = dma.done [#allocation9], 1024
        $region76: #{tpu_custom_call.1} parent=55 // pred_fallthru
          _
        %s379 = sand.u32 %s36, 1
        %s380 = scalar_lea.sflag [#allocation3], %s379
        %s381 = sand.u32 %s36, 1
        %s382 = smul.addr %s381, 28
        %s383 = scalar_lea.vmem [#allocation2], %s382
        %p384 = pneg %p49
        %p385 = pneg %p46
        %p386 = pneg %p70
        %p387 = pneg %p67
        %p388 = pneg %p91
        %p389 = pneg %p88
        %p390 = pneg %p112
        %p391 = pneg %p109
        %p392 = pneg %p133
        %p393 = pneg %p130
        %p394 = pneg %p154
        %p395 = pneg %p151
        %p396 = pneg %p175
        %p397 = pneg %p172
        %p398 = pneg %p196
        %p399 = pneg %p193
        %p400 = pneg %p217
        %p401 = pneg %p214
        %p402 = pneg %p243
        %p403 = pneg %p240
        %s404 = sand.u32 %s230, 1
        %s405 = scalar_lea.sflag [#allocation4], %s404
        %s406 = sand.u32 %s230, 1
        %s407 = smul.addr %s406, 56
        %s408 = scalar_lea.vmem [#allocation11], %s407
        %s409 = smul.u32 7, %s28
        %s410 = smul.u32 7, %s28
        %v412 = vld [vmem:[%s358] sm:$0xf]
        %v413 = vld [vmem:[%s358 + $0x4] sm:$0xf]
        %v414 = vld [vmem:[%s358 + $0x8] sm:$0xf]
        %v415 = vld [vmem:[%s358 + $0xc] sm:$0xf]
        %v416 = vld [vmem:[%s358 + $0x10] sm:$0xf]
        %v417 = vld [vmem:[%s358 + $0x14] sm:$0xf]
        %v418 = vld [vmem:[%s358 + $0x18] sm:$0xf]
        %v419 = vld [vmem:[#allocation5] sm:$0xf]
        %v420 = vld [vmem:[#allocation5 + $0x4] sm:$0xf]
        %v421 = vld [vmem:[#allocation5 + $0x8] sm:$0xf]
        %v422 = vld [vmem:[#allocation5 + $0xc] sm:$0xf]
        %v423 = vld [vmem:[#allocation5 + $0x10] sm:$0xf]
        %v424 = vld [vmem:[#allocation5 + $0x14] sm:$0xf]
        %v425 = vld [vmem:[#allocation5 + $0x18] sm:$0xf]
        %v426 = vld [vmem:[#allocation5 + $0x1c] sm:$0xf]
        %v427 = vld [vmem:[#allocation5 + $0x20] sm:$0xf]
        %v428 = vld [vmem:[#allocation5 + $0x24] sm:$0xf]
        %v429 = vld [vmem:[#allocation5 + $0x28] sm:$0xf]
        %v430 = vld [vmem:[#allocation5 + $0x2c] sm:$0xf]
        %v431 = vld [vmem:[#allocation5 + $0x30] sm:$0xf]
        %v432 = vld [vmem:[#allocation5 + $0x34] sm:$0xf]
        %v433 = vld [vmem:[#allocation5 + $0x38] sm:$0xf]
        %v434 = vld [vmem:[#allocation5 + $0x3c] sm:$0xf]
        %v435 = vld [vmem:[%s2] sm:$0x1]
        %v437 = vlaneseq
        %v438 = vshrl.u32 %v437, 7
        %v439 = vsub.s32 0, %v438
        %v440 = vrot.slane %v435, %v439
        %v449 = vunpack.c.l.b16 %v412
        %v450 = vunpack.c.l.b16 %v413
        %v451 = vunpack.c.l.b16 %v414
        %v452 = vunpack.c.l.b16 %v415
        %v453 = vunpack.c.l.b16 %v416
        %v454 = vunpack.c.l.b16 %v417
        %v455 = vunpack.c.l.b16 %v418
        %v456 = vpack.c.b16 %v450, %v449
        %v457 = vpack.c.b16 %v452, %v451
        %v458 = vpack.c.b16 %v454, %v453
        %v459 = vpack.c.b16 %v455, %v455
        %v480 = vunpack.c.l.b16 %v419
        %v481 = vunpack.c.l.b16 %v420
        %v482 = vunpack.c.l.b16 %v421
        %v483 = vunpack.c.l.b16 %v422
        %v484 = vunpack.c.l.b16 %v423
        %v485 = vunpack.c.l.b16 %v424
        %v486 = vunpack.c.l.b16 %v425
        %v487 = vunpack.c.l.b16 %v426
        %v488 = vunpack.c.l.b16 %v427
        %v489 = vunpack.c.l.b16 %v428
        %v490 = vunpack.c.l.b16 %v429
        %v491 = vunpack.c.l.b16 %v430
        %v492 = vunpack.c.l.b16 %v431
        %v493 = vunpack.c.l.b16 %v432
        %v494 = vunpack.c.l.b16 %v433
        %v495 = vunpack.c.l.b16 %v434
        %v496 = vpack.c.b16 %v481, %v480
        %v497 = vpack.c.b16 %v483, %v482
        %v498 = vpack.c.b16 %v485, %v484
        %v499 = vpack.c.b16 %v487, %v486
        %v500 = vpack.c.b16 %v489, %v488
        %v501 = vpack.c.b16 %v491, %v490
        %v502 = vpack.c.b16 %v493, %v492
        %v503 = vpack.c.b16 %v495, %v494
        %512 = vmatprep.subr.bf16.mxu0 0
        %513 = vmatpush1.bf16.msra.mxu0 %v496
        %514 = vmatprep.subr.bf16.mxu0 0
        %515 = vmatpush1.bf16.msra.mxu0 %v497
        %516 = vmatprep.subr.bf16.mxu0 0
        %517 = vmatpush1.bf16.msra.mxu0 %v498
        %518 = vmatprep.subr.bf16.mxu0 0
        %519 = vmatpush1.bf16.msra.mxu0 %v499
        %520 = vmatprep.subr.bf16.mxu0 0
        %521 = vmatpush1.bf16.msra.mxu0 %v500
        %522 = vmatprep.subr.bf16.mxu0 0
        %523 = vmatpush1.bf16.msra.mxu0 %v501
        %524 = vmatprep.subr.bf16.mxu0 0
        %525 = vmatpush1.bf16.msra.mxu0 %v502
        %526 = vmatprep.subr.bf16.mxu0 0
        %527 = vmatpush1.bf16.msra.mxu0 %v503
        %528 = vmatprep.subr.bf16.mxu0 0
        %529 = vmatpush1.bf16.msra.mxu0 0
        %530 = vmatprep.subr.bf16.mxu0 0
        %531 = vmatpush1.bf16.msra.mxu0 0
        %532 = vmatprep.subr.bf16.mxu0 0
        %533 = vmatpush1.bf16.msra.mxu0 0
        %534 = vmatprep.subr.bf16.mxu0 0
        %535 = vmatpush1.bf16.msra.mxu0 0
        %536 = vmatprep.subr.bf16.mxu0 0
        %537 = vmatpush1.bf16.msra.mxu0 0
        %538 = vmatprep.subr.bf16.mxu0 0
        %539 = vmatpush1.bf16.msra.mxu0 0
        %540 = vmatprep.subr.bf16.mxu0 0
        %541 = vmatpush1.bf16.msra.mxu0 0
        %542 = vmatprep.subr.bf16.mxu0 0
        %543 = vmatpush1.bf16.msra.mxu0 0
        %544 = vmatprep.mubr.bf16.mxu0 0
        %545 = vmatmul.mubr.bf16.gmra.mrb[0].mxu0 %v456
        %v546 = vpop.f32.mrb[0].mxu0
        %v547 = vadd.f32 %v440, %v546
        %v548 = vpop.f32.mrb[0].mxu0
        %v549 = vpop.f32.mrb[0].mxu0
        %v550 = vadd.f32 %v440, %v549
        %v551 = vpop.f32.mrb[0].mxu0
        %552 = vmatprep.mubr.bf16.mxu0 0
        %553 = vmatmul.mubr.bf16.gmra.mrb[0].mxu0 %v457
        %v554 = vpop.f32.mrb[0].mxu0
        %v555 = vadd.f32 %v440, %v554
        %v556 = vpop.f32.mrb[0].mxu0
        %v557 = vpop.f32.mrb[0].mxu0
        %v558 = vadd.f32 %v440, %v557
        %v559 = vpop.f32.mrb[0].mxu0
        %560 = vmatprep.mubr.bf16.mxu0 0
        %561 = vmatmul.mubr.bf16.gmra.mrb[0].mxu0 %v458
        %v562 = vpop.f32.mrb[0].mxu0
        %v563 = vadd.f32 %v440, %v562
        %v564 = vpop.f32.mrb[0].mxu0
        %v565 = vpop.f32.mrb[0].mxu0
        %v566 = vadd.f32 %v440, %v565
        %v567 = vpop.f32.mrb[0].mxu0
        %568 = vmatprep.mubr.bf16.mxu0 0
        %569 = vmatmul.mubr.bf16.gmra.mrb[0].mxu0 %v459
        %v570 = vpop.f32.mrb[0].mxu0
        %v571 = vadd.f32 %v440, %v570
        %v572 = vpop.f32.mrb[0].mxu0
        %v573 = vpop.f32.mrb[0].mxu0
        %v574 = vpop.f32.mrb[0].mxu0
        %575 = vdwg.mxu0
        %v576 = vmax.f32 %v547, 0.0
        %v577 = vmax.f32 %v550, 0.0
        %v578 = vmax.f32 %v555, 0.0
        %v579 = vmax.f32 %v558, 0.0
        %v580 = vmax.f32 %v563, 0.0
        %v581 = vmax.f32 %v566, 0.0
        %v582 = vmax.f32 %v571, 0.0
        %v583 = vpack.c.bf16 %v577, %v576
        %v584 = vpack.c.bf16 %v579, %v578
        %v585 = vpack.c.bf16 %v581, %v580
        %v586 = vpack.c.bf16 %v582, %v582
        %v587 = vld [vmem:[#allocation7] sm:$0xf]
        %v588 = vld [vmem:[#allocation7 + $0x4] sm:$0xf]
        %v589 = vld [vmem:[#allocation7 + $0x8] sm:$0xf]
        %v590 = vld [vmem:[#allocation7 + $0xc] sm:$0xf]
        %v591 = vld [vmem:[#allocation7 + $0x10] sm:$0xf]
        %v592 = vld [vmem:[#allocation7 + $0x14] sm:$0xf]
        %v593 = vld [vmem:[#allocation7 + $0x18] sm:$0xf]
        %v594 = vld [vmem:[#allocation7 + $0x1c] sm:$0xf]
        %v595 = vld [vmem:[#allocation7 + $0x20] sm:$0xf]
        %v596 = vld [vmem:[#allocation7 + $0x24] sm:$0xf]
        %v597 = vld [vmem:[#allocation7 + $0x28] sm:$0xf]
        %v598 = vld [vmem:[#allocation7 + $0x2c] sm:$0xf]
        %v599 = vld [vmem:[#allocation7 + $0x30] sm:$0xf]
        %v600 = vld [vmem:[#allocation7 + $0x34] sm:$0xf]
        %v601 = vld [vmem:[#allocation7 + $0x38] sm:$0xf]
        %v602 = vld [vmem:[#allocation7 + $0x3c] sm:$0xf]
        %v603 = vld [vmem:[%s4] sm:$0x1]
        %v605 = vlaneseq
        %v606 = vshrl.u32 %v605, 7
        %v607 = vsub.s32 0, %v606
        %v608 = vrot.slane %v603, %v607
        %v626 = vunpack.c.l.b16 %v587
        %v627 = vunpack.c.l.b16 %v588
        %v628 = vunpack.c.l.b16 %v589
        %v629 = vunpack.c.l.b16 %v590
        %v630 = vunpack.c.l.b16 %v591
        %v631 = vunpack.c.l.b16 %v592
        %v632 = vunpack.c.l.b16 %v593
        %v633 = vunpack.c.l.b16 %v594
        %v634 = vunpack.c.l.b16 %v595
        %v635 = vunpack.c.l.b16 %v596
        %v636 = vunpack.c.l.b16 %v597
        %v637 = vunpack.c.l.b16 %v598
        %v638 = vunpack.c.l.b16 %v599
        %v639 = vunpack.c.l.b16 %v600
        %v640 = vunpack.c.l.b16 %v601
        %v641 = vunpack.c.l.b16 %v602
        %v642 = vpack.c.b16 %v627, %v626
        %v643 = vpack.c.b16 %v629, %v628
        %v644 = vpack.c.b16 %v631, %v630
        %v645 = vpack.c.b16 %v633, %v632
        %v646 = vpack.c.b16 %v635, %v634
        %v647 = vpack.c.b16 %v637, %v636
        %v648 = vpack.c.b16 %v639, %v638
        %v649 = vpack.c.b16 %v641, %v640
        %658 = vmatprep.subr.bf16.mxu0 0
        %659 = vmatpush1.bf16.msra.mxu0 %v642
        %660 = vmatprep.subr.bf16.mxu0 0
        %661 = vmatpush1.bf16.msra.mxu0 %v643
        %662 = vmatprep.subr.bf16.mxu0 0
        %663 = vmatpush1.bf16.msra.mxu0 %v644
        %664 = vmatprep.subr.bf16.mxu0 0
        %665 = vmatpush1.bf16.msra.mxu0 %v645
        %666 = vmatprep.subr.bf16.mxu0 0
        %667 = vmatpush1.bf16.msra.mxu0 %v646
        %668 = vmatprep.subr.bf16.mxu0 0
        %669 = vmatpush1.bf16.msra.mxu0 %v647
        %670 = vmatprep.subr.bf16.mxu0 0
        %671 = vmatpush1.bf16.msra.mxu0 %v648
        %672 = vmatprep.subr.bf16.mxu0 0
        %673 = vmatpush1.bf16.msra.mxu0 %v649
        %674 = vmatprep.subr.bf16.mxu0 0
        %675 = vmatpush1.bf16.msra.mxu0 0
        %676 = vmatprep.subr.bf16.mxu0 0
        %677 = vmatpush1.bf16.msra.mxu0 0
        %678 = vmatprep.subr.bf16.mxu0 0
        %679 = vmatpush1.bf16.msra.mxu0 0
        %680 = vmatprep.subr.bf16.mxu0 0
        %681 = vmatpush1.bf16.msra.mxu0 0
        %682 = vmatprep.subr.bf16.mxu0 0
        %683 = vmatpush1.bf16.msra.mxu0 0
        %684 = vmatprep.subr.bf16.mxu0 0
        %685 = vmatpush1.bf16.msra.mxu0 0
        %686 = vmatprep.subr.bf16.mxu0 0
        %687 = vmatpush1.bf16.msra.mxu0 0
        %688 = vmatprep.subr.bf16.mxu0 0
        %689 = vmatpush1.bf16.msra.mxu0 0
        %690 = vmatprep.mubr.bf16.mxu0 0
        %691 = vmatmul.mubr.bf16.gmra.mrb[0].mxu0 %v583
        %v692 = vpop.f32.mrb[0].mxu0
        %v693 = vadd.f32 %v608, %v692
        %v694 = vpop.f32.mrb[0].mxu0
        %v695 = vpop.f32.mrb[0].mxu0
        %v696 = vadd.f32 %v608, %v695
        %v697 = vpop.f32.mrb[0].mxu0
        %698 = vmatprep.mubr.bf16.mxu0 0
        %699 = vmatmul.mubr.bf16.gmra.mrb[0].mxu0 %v584
        %v700 = vpop.f32.mrb[0].mxu0
        %v701 = vadd.f32 %v608, %v700
        %v702 = vpop.f32.mrb[0].mxu0
        %v703 = vpop.f32.mrb[0].mxu0
        %v704 = vadd.f32 %v608, %v703
        %v705 = vpop.f32.mrb[0].mxu0
        %706 = vmatprep.mubr.bf16.mxu0 0
        %707 = vmatmul.mubr.bf16.gmra.mrb[0].mxu0 %v585
        %v708 = vpop.f32.mrb[0].mxu0
        %v709 = vadd.f32 %v608, %v708
        %v710 = vpop.f32.mrb[0].mxu0
        %v711 = vpop.f32.mrb[0].mxu0
        %v712 = vadd.f32 %v608, %v711
        %v713 = vpop.f32.mrb[0].mxu0
        %714 = vmatprep.mubr.bf16.mxu0 0
        %715 = vmatmul.mubr.bf16.gmra.mrb[0].mxu0 %v586
        %v716 = vpop.f32.mrb[0].mxu0
        %v717 = vadd.f32 %v608, %v716
        %v718 = vpop.f32.mrb[0].mxu0
        %v719 = vpop.f32.mrb[0].mxu0
        %v720 = vpop.f32.mrb[0].mxu0
        %721 = vdwg.mxu0
        %v722 = vadd.f32 %v693, %v576
        %v723 = vadd.f32 %v696, %v577
        %v724 = vadd.f32 %v701, %v578
        %v725 = vadd.f32 %v704, %v579
        %v726 = vadd.f32 %v709, %v580
        %v727 = vadd.f32 %v712, %v581
        %v728 = vadd.f32 %v717, %v582
        %v729 = vmax.f32 %v722, 0.0
        %v730 = vmax.f32 %v723, 0.0
        %v731 = vmax.f32 %v724, 0.0
        %v732 = vmax.f32 %v725, 0.0
        %v733 = vmax.f32 %v726, 0.0
        %v734 = vmax.f32 %v727, 0.0
        %v735 = vmax.f32 %v728, 0.0
        %v736 = vpack.c.bf16 %v730, %v729
        %v737 = vpack.c.bf16 %v732, %v731
        %v738 = vpack.c.bf16 %v734, %v733
        %v739 = vpack.c.bf16 %v735, %v735
        %v740 = vld [vmem:[#allocation8] sm:$0xf]
        %v741 = vld [vmem:[#allocation8 + $0x4] sm:$0xf]
        %v742 = vld [vmem:[#allocation8 + $0x8] sm:$0xf]
        %v743 = vld [vmem:[#allocation8 + $0xc] sm:$0xf]
        %v744 = vld [vmem:[#allocation8 + $0x10] sm:$0xf]
        %v745 = vld [vmem:[#allocation8 + $0x14] sm:$0xf]
        %v746 = vld [vmem:[#allocation8 + $0x18] sm:$0xf]
        %v747 = vld [vmem:[#allocation8 + $0x1c] sm:$0xf]
        %v748 = vld [vmem:[#allocation8 + $0x20] sm:$0xf]
        %v749 = vld [vmem:[#allocation8 + $0x24] sm:$0xf]
        %v750 = vld [vmem:[#allocation8 + $0x28] sm:$0xf]
        %v751 = vld [vmem:[#allocation8 + $0x2c] sm:$0xf]
        %v752 = vld [vmem:[#allocation8 + $0x30] sm:$0xf]
        %v753 = vld [vmem:[#allocation8 + $0x34] sm:$0xf]
        %v754 = vld [vmem:[#allocation8 + $0x38] sm:$0xf]
        %v755 = vld [vmem:[#allocation8 + $0x3c] sm:$0xf]
        %v756 = vld [vmem:[%s6] sm:$0x1]
        %v758 = vlaneseq
        %v759 = vshrl.u32 %v758, 7
        %v760 = vsub.s32 0, %v759
        %v761 = vrot.slane %v756, %v760
        %v779 = vunpack.c.l.b16 %v740
        %v780 = vunpack.c.l.b16 %v741
        %v781 = vunpack.c.l.b16 %v742
        %v782 = vunpack.c.l.b16 %v743
        %v783 = vunpack.c.l.b16 %v744
        %v784 = vunpack.c.l.b16 %v745
        %v785 = vunpack.c.l.b16 %v746
        %v786 = vunpack.c.l.b16 %v747
        %v787 = vunpack.c.l.b16 %v748
        %v788 = vunpack.c.l.b16 %v749
        %v789 = vunpack.c.l.b16 %v750
        %v790 = vunpack.c.l.b16 %v751
        %v791 = vunpack.c.l.b16 %v752
        %v792 = vunpack.c.l.b16 %v753
        %v793 = vunpack.c.l.b16 %v754
        %v794 = vunpack.c.l.b16 %v755
        %v795 = vpack.c.b16 %v780, %v779
        %v796 = vpack.c.b16 %v782, %v781
        %v797 = vpack.c.b16 %v784, %v783
        %v798 = vpack.c.b16 %v786, %v785
        %v799 = vpack.c.b16 %v788, %v787
        %v800 = vpack.c.b16 %v790, %v789
        %v801 = vpack.c.b16 %v792, %v791
        %v802 = vpack.c.b16 %v794, %v793
        %811 = vmatprep.subr.bf16.mxu0 0
        %812 = vmatpush1.bf16.msra.mxu0 %v795
        %813 = vmatprep.subr.bf16.mxu0 0
        %814 = vmatpush1.bf16.msra.mxu0 %v796
        %815 = vmatprep.subr.bf16.mxu0 0
        %816 = vmatpush1.bf16.msra.mxu0 %v797
        %817 = vmatprep.subr.bf16.mxu0 0
        %818 = vmatpush1.bf16.msra.mxu0 %v798
        %819 = vmatprep.subr.bf16.mxu0 0
        %820 = vmatpush1.bf16.msra.mxu0 %v799
        %821 = vmatprep.subr.bf16.mxu0 0
        %822 = vmatpush1.bf16.msra.mxu0 %v800
        %823 = vmatprep.subr.bf16.mxu0 0
        %824 = vmatpush1.bf16.msra.mxu0 %v801
        %825 = vmatprep.subr.bf16.mxu0 0
        %826 = vmatpush1.bf16.msra.mxu0 %v802
        %827 = vmatprep.subr.bf16.mxu0 0
        %828 = vmatpush1.bf16.msra.mxu0 0
        %829 = vmatprep.subr.bf16.mxu0 0
        %830 = vmatpush1.bf16.msra.mxu0 0
        %831 = vmatprep.subr.bf16.mxu0 0
        %832 = vmatpush1.bf16.msra.mxu0 0
        %833 = vmatprep.subr.bf16.mxu0 0
        %834 = vmatpush1.bf16.msra.mxu0 0
        %835 = vmatprep.subr.bf16.mxu0 0
        %836 = vmatpush1.bf16.msra.mxu0 0
        %837 = vmatprep.subr.bf16.mxu0 0
        %838 = vmatpush1.bf16.msra.mxu0 0
        %839 = vmatprep.subr.bf16.mxu0 0
        %840 = vmatpush1.bf16.msra.mxu0 0
        %841 = vmatprep.subr.bf16.mxu0 0
        %842 = vmatpush1.bf16.msra.mxu0 0
        %843 = vmatprep.mubr.bf16.mxu0 0
        %844 = vmatmul.mubr.bf16.gmra.mrb[0].mxu0 %v736
        %v845 = vpop.f32.mrb[0].mxu0
        %v846 = vadd.f32 %v761, %v845
        %v847 = vpop.f32.mrb[0].mxu0
        %v848 = vpop.f32.mrb[0].mxu0
        %v849 = vadd.f32 %v761, %v848
        %v850 = vpop.f32.mrb[0].mxu0
        %851 = vmatprep.mubr.bf16.mxu0 0
        %852 = vmatmul.mubr.bf16.gmra.mrb[0].mxu0 %v737
        %v853 = vpop.f32.mrb[0].mxu0
        %v854 = vadd.f32 %v761, %v853
        %v855 = vpop.f32.mrb[0].mxu0
        %v856 = vpop.f32.mrb[0].mxu0
        %v857 = vadd.f32 %v761, %v856
        %v858 = vpop.f32.mrb[0].mxu0
        %859 = vmatprep.mubr.bf16.mxu0 0
        %860 = vmatmul.mubr.bf16.gmra.mrb[0].mxu0 %v738
        %v861 = vpop.f32.mrb[0].mxu0
        %v862 = vadd.f32 %v761, %v861
        %v863 = vpop.f32.mrb[0].mxu0
        %v864 = vpop.f32.mrb[0].mxu0
        %v865 = vadd.f32 %v761, %v864
        %v866 = vpop.f32.mrb[0].mxu0
        %867 = vmatprep.mubr.bf16.mxu0 0
        %868 = vmatmul.mubr.bf16.gmra.mrb[0].mxu0 %v739
        %v869 = vpop.f32.mrb[0].mxu0
        %v870 = vadd.f32 %v761, %v869
        %v871 = vpop.f32.mrb[0].mxu0
        %v872 = vpop.f32.mrb[0].mxu0
        %v873 = vpop.f32.mrb[0].mxu0
        %874 = vdwg.mxu0
        %v875 = vmax.f32 %v846, 0.0
        %v876 = vmax.f32 %v849, 0.0
        %v877 = vmax.f32 %v854, 0.0
        %v878 = vmax.f32 %v857, 0.0
        %v879 = vmax.f32 %v862, 0.0
        %v880 = vmax.f32 %v865, 0.0
        %v881 = vmax.f32 %v870, 0.0
        %v882 = vpack.c.bf16 %v876, %v875
        %v883 = vpack.c.bf16 %v878, %v877
        %v884 = vpack.c.bf16 %v880, %v879
        %v885 = vpack.c.bf16 %v881, %v881
        %v886 = vld [vmem:[#allocation10] sm:$0xf]
        %v887 = vld [vmem:[#allocation10 + $0x4] sm:$0xf]
        %v888 = vld [vmem:[#allocation10 + $0x8] sm:$0xf]
        %v889 = vld [vmem:[#allocation10 + $0xc] sm:$0xf]
        %v890 = vld [vmem:[#allocation10 + $0x10] sm:$0xf]
        %v891 = vld [vmem:[#allocation10 + $0x14] sm:$0xf]
        %v892 = vld [vmem:[#allocation10 + $0x18] sm:$0xf]
        %v893 = vld [vmem:[#allocation10 + $0x1c] sm:$0xf]
        %v894 = vld [vmem:[#allocation10 + $0x20] sm:$0xf]
        %v895 = vld [vmem:[#allocation10 + $0x24] sm:$0xf]
        %v896 = vld [vmem:[#allocation10 + $0x28] sm:$0xf]
        %v897 = vld [vmem:[#allocation10 + $0x2c] sm:$0xf]
        %v898 = vld [vmem:[#allocation10 + $0x30] sm:$0xf]
        %v899 = vld [vmem:[#allocation10 + $0x34] sm:$0xf]
        %v900 = vld [vmem:[#allocation10 + $0x38] sm:$0xf]
        %v901 = vld [vmem:[#allocation10 + $0x3c] sm:$0xf]
        %v902 = vld [vmem:[%s8] sm:$0x1]
        %v904 = vlaneseq
        %v905 = vshrl.u32 %v904, 7
        %v906 = vsub.s32 0, %v905
        %v907 = vrot.slane %v902, %v906
        %v925 = vunpack.c.l.b16 %v886
        %v926 = vunpack.c.l.b16 %v887
        %v927 = vunpack.c.l.b16 %v888
        %v928 = vunpack.c.l.b16 %v889
        %v929 = vunpack.c.l.b16 %v890
        %v930 = vunpack.c.l.b16 %v891
        %v931 = vunpack.c.l.b16 %v892
        %v932 = vunpack.c.l.b16 %v893
        %v933 = vunpack.c.l.b16 %v894
        %v934 = vunpack.c.l.b16 %v895
        %v935 = vunpack.c.l.b16 %v896
        %v936 = vunpack.c.l.b16 %v897
        %v937 = vunpack.c.l.b16 %v898
        %v938 = vunpack.c.l.b16 %v899
        %v939 = vunpack.c.l.b16 %v900
        %v940 = vunpack.c.l.b16 %v901
        %v941 = vpack.c.b16 %v926, %v925
        %v942 = vpack.c.b16 %v928, %v927
        %v943 = vpack.c.b16 %v930, %v929
        %v944 = vpack.c.b16 %v932, %v931
        %v945 = vpack.c.b16 %v934, %v933
        %v946 = vpack.c.b16 %v936, %v935
        %v947 = vpack.c.b16 %v938, %v937
        %v948 = vpack.c.b16 %v940, %v939
        %957 = vmatprep.subr.bf16.mxu0 0
        %958 = vmatpush1.bf16.msra.mxu0 %v941
        %959 = vmatprep.subr.bf16.mxu0 0
        %960 = vmatpush1.bf16.msra.mxu0 %v942
        %961 = vmatprep.subr.bf16.mxu0 0
        %962 = vmatpush1.bf16.msra.mxu0 %v943
        %963 = vmatprep.subr.bf16.mxu0 0
        %964 = vmatpush1.bf16.msra.mxu0 %v944
        %965 = vmatprep.subr.bf16.mxu0 0
        %966 = vmatpush1.bf16.msra.mxu0 %v945
        %967 = vmatprep.subr.bf16.mxu0 0
        %968 = vmatpush1.bf16.msra.mxu0 %v946
        %969 = vmatprep.subr.bf16.mxu0 0
        %970 = vmatpush1.bf16.msra.mxu0 %v947
        %971 = vmatprep.subr.bf16.mxu0 0
        %972 = vmatpush1.bf16.msra.mxu0 %v948
        %973 = vmatprep.subr.bf16.mxu0 0
        %974 = vmatpush1.bf16.msra.mxu0 0
        %975 = vmatprep.subr.bf16.mxu0 0
        %976 = vmatpush1.bf16.msra.mxu0 0
        %977 = vmatprep.subr.bf16.mxu0 0
        %978 = vmatpush1.bf16.msra.mxu0 0
        %979 = vmatprep.subr.bf16.mxu0 0
        %980 = vmatpush1.bf16.msra.mxu0 0
        %981 = vmatprep.subr.bf16.mxu0 0
        %982 = vmatpush1.bf16.msra.mxu0 0
        %983 = vmatprep.subr.bf16.mxu0 0
        %984 = vmatpush1.bf16.msra.mxu0 0
        %985 = vmatprep.subr.bf16.mxu0 0
        %986 = vmatpush1.bf16.msra.mxu0 0
        %987 = vmatprep.subr.bf16.mxu0 0
        %988 = vmatpush1.bf16.msra.mxu0 0
        %989 = vmatprep.mubr.bf16.mxu0 0
        %990 = vmatmul.mubr.bf16.gmra.mrb[0].mxu0 %v882
        %v991 = vpop.f32.mrb[0].mxu0
        %v992 = vadd.f32 %v907, %v991
        %v993 = vpop.f32.mrb[0].mxu0
        %v994 = vpop.f32.mrb[0].mxu0
        %v995 = vadd.f32 %v907, %v994
        %v996 = vpop.f32.mrb[0].mxu0
        %997 = vmatprep.mubr.bf16.mxu0 0
        %998 = vmatmul.mubr.bf16.gmra.mrb[0].mxu0 %v883
        %v999 = vpop.f32.mrb[0].mxu0
        %v1000 = vadd.f32 %v907, %v999
        %v1001 = vpop.f32.mrb[0].mxu0
        %v1002 = vpop.f32.mrb[0].mxu0
        %v1003 = vadd.f32 %v907, %v1002
        %v1004 = vpop.f32.mrb[0].mxu0
        %1005 = vmatprep.mubr.bf16.mxu0 0
        %1006 = vmatmul.mubr.bf16.gmra.mrb[0].mxu0 %v884
        %v1007 = vpop.f32.mrb[0].mxu0
        %v1008 = vadd.f32 %v907, %v1007
        %v1009 = vpop.f32.mrb[0].mxu0
        %v1010 = vpop.f32.mrb[0].mxu0
        %v1011 = vadd.f32 %v907, %v1010
        %v1012 = vpop.f32.mrb[0].mxu0
        %1013 = vmatprep.mubr.bf16.mxu0 0
        %1014 = vmatmul.mubr.bf16.gmra.mrb[0].mxu0 %v885
        %v1015 = vpop.f32.mrb[0].mxu0
        %v1016 = vadd.f32 %v907, %v1015
        %v1017 = vpop.f32.mrb[0].mxu0
        %v1018 = vpop.f32.mrb[0].mxu0
        %v1019 = vpop.f32.mrb[0].mxu0
        %1020 = vdwg.mxu0
        %1021 = vst [vmem:[%s408] sm:$0xff] %v992
        %1022 = vst [vmem:[%s408 + $0x8] sm:$0xff] %v995
        %1023 = vst [vmem:[%s408 + $0x10] sm:$0xff] %v1000
        %1024 = vst [vmem:[%s408 + $0x18] sm:$0xff] %v1003
        %1025 = vst [vmem:[%s408 + $0x20] sm:$0xff] %v1008
        %1026 = vst [vmem:[%s408 + $0x28] sm:$0xff] %v1011
        %1027 = vst [vmem:[%s408 + $0x30] sm:$0xff] %v1016
        %s1028 = sand.u32 %s230, 1
        %s1029 = scalar_lea.sflag [#allocation4], %s1028
        %s1030 = sand.u32 %s230, 1
        %s1031 = smul.addr %s1030, 56
        %s1032 = scalar_lea.vmem [#allocation11], %s1031
        // Predicated region
        $region77: #{tpu_custom_call.1} parent=55 // pred_check
          %p1033 = pneg %p240
        $region78: #{tpu_custom_call.1} parent=55 // pred_check_branch
          %1035 = sbr.rel (%p1033) target = $region80
        $region79: #{tpu_custom_call.1} parent=55 // pred_region
          %s1036 = smul.u32 7, %s28
          %s1038 = ssub.s32 896, 896
          %1039 = vsyncadd %s1029, %s1038
          %s1040 = smul.addr %s1036, 128
          %s1041 = scalar_lea.hbm %s9, %s1040
          %s1042 = sshll.u32 %s1032, 4
          %s1043 = int_to_ptr.vmem [resolvable:$true] %s1042
          %1048 = dma.vmem_to_hbm [thread:$0]  %s1043, 896, %s1041, %s1029, 128, 128, 8
        $region80: #{tpu_custom_call.1} parent=55 // pred_fallthru
          _
      $region56: #{tpu_custom_call.1} parent=5 // pred_fallthru
        _
      %p1049 = scmp.le.s32.totalorder 2, %s23
      // Predicated region
      $region81: #{tpu_custom_call.1} parent=5 // pred_check
        %p1050 = pneg %p1049
      $region82: #{tpu_custom_call.1} parent=5 // pred_check_branch
        %1052 = sbr.rel (%p1050) target = $region84
      $region83: #{tpu_custom_call.1} parent=5 // pred_region
        %s1053 = ssub.s32 %s23, 2
        // Predicated region
        $region85: #{tpu_custom_call.1} parent=83 // pred_check
          %p1054 = pneg %p246
        $region86: #{tpu_custom_call.1} parent=83 // pred_check_branch
          %1056 = sbr.rel (%p1054) target = $region88
        $region87: #{tpu_custom_call.1} parent=83 // pred_region
          %s1057 = sand.u32 %s231, 1
          %s1058 = scalar_lea.sflag [#allocation4], %s1057
          %s1059 = sand.u32 %s231, 1
          %s1060 = smul.addr %s1059, 56
          %s1061 = scalar_lea.vmem [#allocation11], %s1060
          %1062 = dma.done %s1058, 896
        $region88: #{tpu_custom_call.1} parent=83 // pred_fallthru
          _
      $region84: #{tpu_custom_call.1} parent=5 // pred_fallthru
        _
    $region6: #{tpu_custom_call.1} parent=1 // loop_footer
      %s27 = sadd.s32 1, %s23
    $region7: #{tpu_custom_call.1} parent=1 // loop_footer_branch
      %22 = sbr.rel target = $region3
    $region8: #{tpu_custom_call.1} parent=1 // loop_exit
      _
    %1063 = vsyncpa [#allocation3], 1
    %s1064 = scalar_lea.sflag [#allocation3], 1
    %1065 = vsyncpa %s1064, 1
    %1066 = vsyncpa [#allocation6], 1
    %1067 = vsyncpa [#allocation9], 1
    %1068 = vsyncpa [#allocation4], 1
    %s1069 = scalar_lea.sflag [#allocation4], 1
    %1070 = vsyncpa %s1069, 1

</llo_original>
